<compile_context>
chip_gen: v5e
topology: v5e:2x2
jax: 0.10.0
libtpu: 0.0.40
codegen_flags: <defaults>
</compile_context>

<pallas_src>
import functools
import math

import jax
import jax.numpy as jnp
from jax.experimental import pallas as pl
from jax.experimental.pallas import tpu as pltpu

EPS = 1e-5


def _logits_kernel(scales_ref,          # SMEM (2,)  [sigmoid(rawS)/sqrt(N), sigmoid(outS)]
                   x_ref,               # VMEM (TT, N)
                   w_ref,               # VMEM (N, V)   (bf16 or f32), single-buffered
                   b_ref,               # VMEM (1, V)   bias (f32)
                   g1_ref, be1_ref,     # VMEM (1, N)   LN_N gamma/beta * sigmoid(normS)/sqrt(N)
                   g2_ref, be2_ref,     # VMEM (1, V)   LN_V gamma/beta * sigmoid(normOutS)
                   o_ref):              # VMEM (TT, V)
    x = x_ref[...].astype(jnp.float32)
    n_neurons = x.shape[-1]
    inv_sqrt_n = 1.0 / math.sqrt(n_neurons)
    clip_lim = 10.0 * inv_sqrt_n        # fold 1/sqrt(N) into the clip bounds

    raw_s = scales_ref[0]               # already carries 1/sqrt(N)
    out_s = scales_ref[1]

    # LayerNorm over numNeurons — single-pass sum / sum-of-squares statistics
    # (biased variance, like torch.nn.LayerNorm).
    inv_n = 1.0 / n_neurons
    s1 = jnp.sum(x, axis=-1, keepdims=True)
    s2 = jnp.sum(x * x, axis=-1, keepdims=True)
    mu = s1 * inv_n
    var = jnp.maximum(s2 * inv_n - mu * mu, 0.0)
    # g1/be1 already include sigmoid(normS) * 1/sqrt(N).
    normed = (x - mu) * jax.lax.rsqrt(var + EPS) * g1_ref[...] + be1_ref[...]

    # clamp(x*rawS + normed*normS, -10, 10)/sqrt(N), with all constant scales
    # folded into raw_s / g1 / be1 / clip_lim.
    lhs = jnp.clip(x * raw_s + normed, -clip_lim, clip_lim).astype(w_ref.dtype)

    # MXU matmul: (TT, N) @ (N, V) with f32 accumulation.
    logit = jnp.dot(lhs, w_ref[...], preferred_element_type=jnp.float32)
    logit = jnp.clip(logit + b_ref[...], -60.0, 60.0)

    # LayerNorm over vocabSize — single-pass statistics.
    n_vocab = logit.shape[-1]
    inv_v = 1.0 / n_vocab
    t1 = jnp.sum(logit, axis=-1, keepdims=True)
    t2 = jnp.sum(logit * logit, axis=-1, keepdims=True)
    mu2 = t1 * inv_v
    var2 = jnp.maximum(t2 * inv_v - mu2 * mu2, 0.0)
    # g2/be2 already include sigmoid(normOutS).
    lnormed = (logit - mu2) * jax.lax.rsqrt(var2 + EPS) * g2_ref[...] + be2_ref[...]

    o_ref[...] = (logit * out_s + lnormed).astype(o_ref.dtype)


def _pick_tile_t(T, requested):
    """Pick a token tile: MXU-sized if possible, dividing T, >=2 grid steps."""
    tt = max(8, min(requested, T))
    while tt > 8 and (T % tt != 0 or T // tt < 2):
        tt //= 2
    if T % tt != 0:
        tt = T                      # ragged small T: single full tile (see TODO)
    return tt


@functools.partial(jax.jit, static_argnames=("tile_t", "out_dtype"))
def logits_forward(x, w, b, gamma1, beta1, gamma2, beta2, scalars, *,
                   tile_t=256, out_dtype=None):
    """x: (T, N) activations; w: (N, V) weights (f32 or bf16). Returns (T, V)."""
    T, N = x.shape
    V = w.shape[1]
    out_dt = jnp.dtype(out_dtype) if out_dtype is not None else jnp.dtype(x.dtype)

    tt = _pick_tile_t(T, tile_t)
    grid = (T // tt,)
    inv_sqrt_n = 1.0 / math.sqrt(N)

    # Hoist the sigmoid(scalar) prep out of the kernel body and fold the
    # constant scales into the small parameter vectors (cheap wrapper ops on
    # (1,N)/(1,V) vectors, NOT the big (T,N)/(T,V) operands).
    sig = jax.nn.sigmoid(scalars.astype(jnp.float32))
    raw_s, norm_s, out_s, normout_s = sig[0], sig[1], sig[2], sig[3]
    scales = jnp.stack([raw_s * inv_sqrt_n, out_s])                      # (2,)

    g1 = (gamma1.astype(jnp.float32) * (norm_s * inv_sqrt_n)).reshape(1, N)
    be1 = (beta1.astype(jnp.float32) * (norm_s * inv_sqrt_n)).reshape(1, N)
    b2 = b.reshape(1, V).astype(jnp.float32)
    g2 = (gamma2.astype(jnp.float32) * normout_s).reshape(1, V)
    be2 = (beta2.astype(jnp.float32) * normout_s).reshape(1, V)

    # Explicit VMEM budget: single-buffered W + params (Buffered(1)),
    # double-buffered x/out tiles, plus headroom for f32 temporaries.
    w_bytes = jnp.dtype(w.dtype).itemsize
    x_bytes = jnp.dtype(x.dtype).itemsize
    o_bytes = out_dt.itemsize
    need = (
        N * V * w_bytes                      # W (resident, single buffer)
        + 2 * tt * N * x_bytes               # x tiles (double-buffered)
        + 2 * tt * V * o_bytes               # output tiles (double-buffered)
        + (2 * N + 3 * V) * 4                # parameter vectors (single buffer)
        + 4 * tt * (N + 2 * V)               # f32 intermediates headroom
    )
    # Generation-aware cap: ~80% of physical VMEM (≈51 MiB v7x, ≈102 MiB v5e/v6e).
    try:
        phys_vmem = int(getattr(pltpu.get_tpu_info(), "vmem_capacity_bytes",
                                128 << 20))
    except Exception:
        phys_vmem = 128 << 20
    cap = int(0.8 * phys_vmem)
    vmem_limit = int(min(max(int(1.25 * need) + (1 << 20), 32 << 20), cap))

    resident = pl.Buffered(1)   # grid-invariant inputs: no pointless double buffer

    return pl.pallas_call(
        _logits_kernel,
        out_shape=jax.ShapeDtypeStruct((T, V), out_dt),
        grid_spec=pltpu.PrefetchScalarGridSpec(
            num_scalar_prefetch=0,
            grid=grid,
            in_specs=[
                pl.BlockSpec(memory_space=pltpu.MemorySpace.SMEM),           # scales (2,)
                pl.BlockSpec((tt, N), lambda i: (i, 0)),                     # x tile
                pl.BlockSpec((N, V), lambda i: (0, 0),
                             pipeline_mode=resident),                        # W (resident)
                pl.BlockSpec((1, V), lambda i: (0, 0), pipeline_mode=resident),  # bias
                pl.BlockSpec((1, N), lambda i: (0, 0), pipeline_mode=resident),  # gamma1'
                pl.BlockSpec((1, N), lambda i: (0, 0), pipeline_mode=resident),  # beta1'
                pl.BlockSpec((1, V), lambda i: (0, 0), pipeline_mode=resident),  # gamma2'
                pl.BlockSpec((1, V), lambda i: (0, 0), pipeline_mode=resident),  # beta2'
            ],
            out_specs=pl.BlockSpec((tt, V), lambda i: (i, 0)),
        ),
        compiler_params=pltpu.CompilerParams(
            dimension_semantics=("parallel",),
            vmem_limit_bytes=vmem_limit,
        ),
    )(scales, x, w, b2, g1, be1, g2, be2)


def reference_forward(x, w, b, gamma1, beta1, gamma2, beta2, scalars):
    raw_s, norm_s, out_s, normout_s = [jax.nn.sigmoid(s) for s in scalars]

    def layernorm(v, g, be):
        mu = jnp.mean(v, axis=-1, keepdims=True)
        var = jnp.mean((v - mu) ** 2, axis=-1, keepdims=True)
        return (v - mu) / jnp.sqrt(var + EPS) * g + be

    normed = layernorm(x, gamma1, beta1)
    scaled = jnp.clip(x * raw_s + normed * norm_s, -10.0, 10.0)
    logit = (jnp.dot(scaled, w, precision=jax.lax.Precision.HIGHEST)
             / math.sqrt(x.shape[-1]) + b)
    logit = jnp.clip(logit, -60.0, 60.0)
    lnormed = layernorm(logit, gamma2, beta2)
    return logit * out_s + lnormed * normout_s


if __name__ == "__main__":
    # Small, module-consistent shapes (large enough for a >=2 step token grid).
    T = 256          # tokens in this forward call
    numNeurons = 256
    vocabSize = 512

    key = jax.random.PRNGKey(0)
    kx, kw = jax.random.split(key)

    x = jax.random.normal(kx, (T, numNeurons), dtype=jnp.float32)

    # Deterministic parameter init matching the torch __init__:
    w_f32 = jax.random.normal(kw, (numNeurons, vocabSize), dtype=jnp.float32)  # randn
    w = w_f32.astype(jnp.bfloat16)        # MXU-native weights for the kernel
    b = jnp.zeros((vocabSize,), jnp.float32)
    gamma1 = jnp.ones((numNeurons,), jnp.float32)     # LayerNorm weight
    beta1 = jnp.zeros((numNeurons,), jnp.float32)     # LayerNorm bias
    gamma2 = jnp.ones((vocabSize,), jnp.float32)
    beta2 = jnp.zeros((vocabSize,), jnp.float32)
    # rawActivationsScale, normedActivationsScale, outputScale, normOutputScale
    scalars = jnp.full((4,), 0.5, jnp.float32)

    out = logits_forward(x, w, b, gamma1, beta1, gamma2, beta2, scalars)
    out = jax.block_until_ready(out)

    ref = reference_forward(x, w_f32, b, gamma1, beta1, gamma2, beta2, scalars)
    assert out.shape == (T, vocabSize)
    # bf16 weights / bf16 MXU LHS + single-pass LN variance vs. the f32
    # HIGHEST-precision reference -> slightly loose tolerance.
    assert jnp.allclose(out, ref, atol=5e-2, rtol=5e-2), "mismatch vs reference"

    print("KERNEL_OK")
</pallas_src>

<mosaic_0001>
module attributes {stable_mosaic.version = 11 : i64} {
  func.func @_logits_kernel(%arg0: i32, %arg1: memref<2xf32, #tpu.memory_space<smem>>, %arg2: memref<128x256xf32, #tpu.memory_space<vmem>>, %arg3: memref<256x512xbf16, #tpu.memory_space<vmem>>, %arg4: memref<1x512xf32, #tpu.memory_space<vmem>>, %arg5: memref<1x256xf32, #tpu.memory_space<vmem>>, %arg6: memref<1x256xf32, #tpu.memory_space<vmem>>, %arg7: memref<1x512xf32, #tpu.memory_space<vmem>>, %arg8: memref<1x512xf32, #tpu.memory_space<vmem>>, %arg9: memref<128x512xf32, #tpu.memory_space<vmem>>) attributes {dimension_semantics = [#tpu.dimension_semantics<parallel>], iteration_bounds = array<i64: 2>, scalar_prefetch = 0 : i64, scratch_operands = 0 : i64, tpu.core_type = #tpu.core_type<tc>, window_params = [{transform_indices = @transform_0, window_bounds = array<i64: 2>}, {transform_indices = @transform_1, window_bounds = array<i64: 128, 256>}, {pipeline_mode = #tpu.pipeline_mode<synchronous>, transform_indices = @transform_2, window_bounds = array<i64: 256, 512>}, {pipeline_mode = #tpu.pipeline_mode<synchronous>, transform_indices = @transform_3, window_bounds = array<i64: 1, 512>}, {pipeline_mode = #tpu.pipeline_mode<synchronous>, transform_indices = @transform_4, window_bounds = array<i64: 1, 256>}, {pipeline_mode = #tpu.pipeline_mode<synchronous>, transform_indices = @transform_5, window_bounds = array<i64: 1, 256>}, {pipeline_mode = #tpu.pipeline_mode<synchronous>, transform_indices = @transform_6, window_bounds = array<i64: 1, 512>}, {pipeline_mode = #tpu.pipeline_mode<synchronous>, transform_indices = @transform_7, window_bounds = array<i64: 1, 512>}, {transform_indices = @transform_8, window_bounds = array<i64: 128, 512>}]} {
    %c0 = arith.constant 0 : index
    %c0_0 = arith.constant 0 : index
    %0 = vector.load %arg2[%c0, %c0_0] : memref<128x256xf32, #tpu.memory_space<vmem>>, vector<128x256xf32>
    %c0_1 = arith.constant 0 : index
    %1 = memref.load %arg1[%c0_1] : memref<2xf32, #tpu.memory_space<smem>>
    %c1 = arith.constant 1 : index
    %2 = memref.load %arg1[%c1] : memref<2xf32, #tpu.memory_space<smem>>
    %cst = arith.constant dense<0.000000e+00> : vector<128xf32>
    %3 = vector.multi_reduction <add>, %0, %cst [1] : vector<128x256xf32> to vector<128xf32>
    %4 = vector.shape_cast %3 : vector<128xf32> to vector<128x1xf32>
    %5 = arith.mulf %0, %0 : vector<128x256xf32>
    %cst_2 = arith.constant dense<0.000000e+00> : vector<128xf32>
    %6 = vector.multi_reduction <add>, %5, %cst_2 [1] : vector<128x256xf32> to vector<128xf32>
    %7 = vector.shape_cast %6 : vector<128xf32> to vector<128x1xf32>
    %cst_3 = arith.constant 3.906250e-03 : f32
    %8 = vector.broadcast %cst_3 : f32 to vector<128x1xf32>
    %9 = arith.mulf %4, %8 : vector<128x1xf32>
    %cst_4 = arith.constant 3.906250e-03 : f32
    %10 = vector.broadcast %cst_4 : f32 to vector<128x1xf32>
    %11 = arith.mulf %7, %10 : vector<128x1xf32>
    %12 = arith.mulf %9, %9 : vector<128x1xf32>
    %13 = arith.subf %11, %12 : vector<128x1xf32>
    %cst_5 = arith.constant 0.000000e+00 : f32
    %14 = vector.broadcast %cst_5 : f32 to vector<128x1xf32>
    %15 = arith.maximumf %13, %14 : vector<128x1xf32>
    %16 = vector.broadcast %9 : vector<128x1xf32> to vector<128x256xf32>
    %17 = arith.subf %0, %16 : vector<128x256xf32>
    %cst_6 = arith.constant 9.99999974E-6 : f32
    %18 = vector.broadcast %cst_6 : f32 to vector<128x1xf32>
    %19 = arith.addf %15, %18 : vector<128x1xf32>
    %20 = math.rsqrt %19 : vector<128x1xf32>
    %21 = vector.broadcast %20 : vector<128x1xf32> to vector<128x256xf32>
    %22 = arith.mulf %17, %21 : vector<128x256xf32>
    %c0_7 = arith.constant 0 : index
    %c0_8 = arith.constant 0 : index
    %23 = vector.load %arg5[%c0_7, %c0_8] : memref<1x256xf32, #tpu.memory_space<vmem>>, vector<1x256xf32>
    %24 = vector.broadcast %23 : vector<1x256xf32> to vector<128x256xf32>
    %25 = arith.mulf %22, %24 : vector<128x256xf32>
    %c0_9 = arith.constant 0 : index
    %c0_10 = arith.constant 0 : index
    %26 = vector.load %arg6[%c0_9, %c0_10] : memref<1x256xf32, #tpu.memory_space<vmem>>, vector<1x256xf32>
    %27 = vector.broadcast %26 : vector<1x256xf32> to vector<128x256xf32>
    %28 = arith.addf %25, %27 : vector<128x256xf32>
    %29 = vector.broadcast %1 : f32 to vector<128x256xf32>
    %30 = arith.mulf %0, %29 : vector<128x256xf32>
    %31 = arith.addf %30, %28 : vector<128x256xf32>
    %cst_11 = arith.constant -6.250000e-01 : f32
    %cst_12 = arith.constant 6.250000e-01 : f32
    %32 = vector.broadcast %cst_11 : f32 to vector<128x256xf32>
    %33 = arith.maximumf %32, %31 : vector<128x256xf32>
    %34 = vector.broadcast %cst_12 : f32 to vector<128x256xf32>
    %35 = arith.minimumf %34, %33 : vector<128x256xf32>
    %36 = arith.truncf %35 : vector<128x256xf32> to vector<128x256xbf16>
    %c0_13 = arith.constant 0 : index
    %c0_14 = arith.constant 0 : index
    %37 = vector.load %arg3[%c0_13, %c0_14] : memref<256x512xbf16, #tpu.memory_space<vmem>>, vector<256x512xbf16>
    %cst_15 = arith.constant dense<0.000000e+00> : vector<128x512xf32>
    %38 = tpu.matmul %36, %37, %cst_15 {dimension_numbers = #tpu.dot_dimension_numbers<[1], [0], [0], [1], [0, 0, 1, 1], [], []>} : vector<128x256xbf16>, vector<256x512xbf16>, vector<128x512xf32> -> vector<128x512xf32>
    %c0_16 = arith.constant 0 : index
    %c0_17 = arith.constant 0 : index
    %39 = vector.load %arg4[%c0_16, %c0_17] : memref<1x512xf32, #tpu.memory_space<vmem>>, vector<1x512xf32>
    %40 = vector.broadcast %39 : vector<1x512xf32> to vector<128x512xf32>
    %41 = arith.addf %38, %40 : vector<128x512xf32>
    %cst_18 = arith.constant -6.000000e+01 : f32
    %cst_19 = arith.constant 6.000000e+01 : f32
    %42 = vector.broadcast %cst_18 : f32 to vector<128x512xf32>
    %43 = arith.maximumf %42, %41 : vector<128x512xf32>
    %44 = vector.broadcast %cst_19 : f32 to vector<128x512xf32>
    %45 = arith.minimumf %44, %43 : vector<128x512xf32>
    %cst_20 = arith.constant dense<0.000000e+00> : vector<128xf32>
    %46 = vector.multi_reduction <add>, %45, %cst_20 [1] : vector<128x512xf32> to vector<128xf32>
    %47 = vector.shape_cast %46 : vector<128xf32> to vector<128x1xf32>
    %48 = arith.mulf %45, %45 : vector<128x512xf32>
    %cst_21 = arith.constant dense<0.000000e+00> : vector<128xf32>
    %49 = vector.multi_reduction <add>, %48, %cst_21 [1] : vector<128x512xf32> to vector<128xf32>
    %50 = vector.shape_cast %49 : vector<128xf32> to vector<128x1xf32>
    %cst_22 = arith.constant 0.001953125 : f32
    %51 = vector.broadcast %cst_22 : f32 to vector<128x1xf32>
    %52 = arith.mulf %47, %51 : vector<128x1xf32>
    %cst_23 = arith.constant 0.001953125 : f32
    %53 = vector.broadcast %cst_23 : f32 to vector<128x1xf32>
    %54 = arith.mulf %50, %53 : vector<128x1xf32>
    %55 = arith.mulf %52, %52 : vector<128x1xf32>
    %56 = arith.subf %54, %55 : vector<128x1xf32>
    %cst_24 = arith.constant 0.000000e+00 : f32
    %57 = vector.broadcast %cst_24 : f32 to vector<128x1xf32>
    %58 = arith.maximumf %56, %57 : vector<128x1xf32>
    %59 = vector.broadcast %52 : vector<128x1xf32> to vector<128x512xf32>
    %60 = arith.subf %45, %59 : vector<128x512xf32>
    %cst_25 = arith.constant 9.99999974E-6 : f32
    %61 = vector.broadcast %cst_25 : f32 to vector<128x1xf32>
    %62 = arith.addf %58, %61 : vector<128x1xf32>
    %63 = math.rsqrt %62 : vector<128x1xf32>
    %64 = vector.broadcast %63 : vector<128x1xf32> to vector<128x512xf32>
    %65 = arith.mulf %60, %64 : vector<128x512xf32>
    %c0_26 = arith.constant 0 : index
    %c0_27 = arith.constant 0 : index
    %66 = vector.load %arg7[%c0_26, %c0_27] : memref<1x512xf32, #tpu.memory_space<vmem>>, vector<1x512xf32>
    %67 = vector.broadcast %66 : vector<1x512xf32> to vector<128x512xf32>
    %68 = arith.mulf %65, %67 : vector<128x512xf32>
    %c0_28 = arith.constant 0 : index
    %c0_29 = arith.constant 0 : index
    %69 = vector.load %arg8[%c0_28, %c0_29] : memref<1x512xf32, #tpu.memory_space<vmem>>, vector<1x512xf32>
    %70 = vector.broadcast %69 : vector<1x512xf32> to vector<128x512xf32>
    %71 = arith.addf %68, %70 : vector<128x512xf32>
    %72 = vector.broadcast %2 : f32 to vector<128x512xf32>
    %73 = arith.mulf %45, %72 : vector<128x512xf32>
    %74 = arith.addf %73, %71 : vector<128x512xf32>
    %c0_30 = arith.constant 0 : index
    %c0_31 = arith.constant 0 : index
    %75 = vector.load %arg9[%c0_30, %c0_31] : memref<128x512xf32, #tpu.memory_space<vmem>>, vector<128x512xf32>
    tpu.vector_store %arg9[%c0_30, %c0_31], %74 {strides = array<i32>} : memref<128x512xf32, #tpu.memory_space<vmem>>, vector<128x512xf32>,
    return
  }
  func.func @transform_0(%arg0: i32) -> i32 {
    %c0_i32 = arith.constant 0 : i32
    %c0_i32_0 = arith.constant 0 : i32
    return %c0_i32 : i32
  }
  func.func @transform_1(%arg0: i32) -> (i32, i32) {
    %c0_i32 = arith.constant 0 : i32
    %c0_i32_0 = arith.constant 0 : i32
    return %arg0, %c0_i32 : i32, i32
  }
  func.func @transform_2(%arg0: i32) -> (i32, i32) {
    %c0_i32 = arith.constant 0 : i32
    %c0_i32_0 = arith.constant 0 : i32
    %c0_i32_1 = arith.constant 0 : i32
    return %c0_i32, %c0_i32_0 : i32, i32
  }
  func.func @transform_3(%arg0: i32) -> (i32, i32) {
    %c0_i32 = arith.constant 0 : i32
    %c0_i32_0 = arith.constant 0 : i32
    %c0_i32_1 = arith.constant 0 : i32
    return %c0_i32, %c0_i32_0 : i32, i32
  }
  func.func @transform_4(%arg0: i32) -> (i32, i32) {
    %c0_i32 = arith.constant 0 : i32
    %c0_i32_0 = arith.constant 0 : i32
    %c0_i32_1 = arith.constant 0 : i32
    return %c0_i32, %c0_i32_0 : i32, i32
  }
  func.func @transform_5(%arg0: i32) -> (i32, i32) {
    %c0_i32 = arith.constant 0 : i32
    %c0_i32_0 = arith.constant 0 : i32
    %c0_i32_1 = arith.constant 0 : i32
    return %c0_i32, %c0_i32_0 : i32, i32
  }
  func.func @transform_6(%arg0: i32) -> (i32, i32) {
    %c0_i32 = arith.constant 0 : i32
    %c0_i32_0 = arith.constant 0 : i32
    %c0_i32_1 = arith.constant 0 : i32
    return %c0_i32, %c0_i32_0 : i32, i32
  }
  func.func @transform_7(%arg0: i32) -> (i32, i32) {
    %c0_i32 = arith.constant 0 : i32
    %c0_i32_0 = arith.constant 0 : i32
    %c0_i32_1 = arith.constant 0 : i32
    return %c0_i32, %c0_i32_0 : i32, i32
  }
  func.func @transform_8(%arg0: i32) -> (i32, i32) {
    %c0_i32 = arith.constant 0 : i32
    %c0_i32_0 = arith.constant 0 : i32
    return %arg0, %c0_i32 : i32, i32
  }
}

</mosaic_0001>

<llo_original>
// kernel: logits_forward.1
$region0: #{logits_forward.1}
  #allocation0 [shape = 'u32[]', space=smem, size = 0x4, offset = 0x4, fixed_abs, tag = 'smem constant byte address 0x4 - core index']
  #allocation1 [shape = 'u32[72,128]{1,0:T(1,128)}', space=vmem, size = 0x9000, scoped, tag = 'internal scratch']
  %s0 = inlined_call_operand.vmem [shape: f32[2], index: 0, kind: input, shape index: {}]
  %s1 = inlined_call_operand.hbm [shape: f32[256,256], index: 1, kind: input, shape index: {}]
  %s2 = inlined_call_operand.hbm [shape: bf16[256,512], index: 2, kind: input, shape index: {}]
  %s3 = inlined_call_operand.vmem [shape: f32[1,512], index: 3, kind: input, shape index: {}]
  %s4 = inlined_call_operand.vmem [shape: f32[1,256], index: 4, kind: input, shape index: {}]
  %s5 = inlined_call_operand.vmem [shape: f32[1,256], index: 5, kind: input, shape index: {}]
  %s6 = inlined_call_operand.vmem [shape: f32[1,512], index: 6, kind: input, shape index: {}]
  %s7 = inlined_call_operand.vmem [shape: f32[1,512], index: 7, kind: input, shape index: {}]
  %s8 = inlined_call_operand.hbm [shape: f32[256,512], index: 8, kind: output, shape index: {}]
  %s9 = sld [smem:[#allocation0]]
  $region77: #{logits_forward.1} parent=0
    _
  %s11 = ssub.s32 1, %s9
  %s12 = scalar_select 0, %s11, %s9
  $region1: #{logits_forward.1} parent=0
    #allocation2 [shape = 'u8[512]{0}', space=smem, size = 0x200, scoped, tag = 'input window, operand 0, single buffered']
    #allocation3 [shape = 's32[2]{0}', space=sflag, size = 0x8, scoped, tag = 'scoped memory for logits_forward.1']
    #allocation4 [shape = 's32[2]{0}', space=sflag, size = 0x8, scoped, tag = 'scoped memory for logits_forward.1']
    #allocation5 [shape = 's32[2]{0}', space=sflag, size = 0x8, scoped, tag = 'scoped memory for logits_forward.1']
    #allocation6 [shape = 'u8[262144]{0}', space=vmem, size = 0x40000, scoped, tag = 'input window, operand 1']
    #allocation7 [shape = 'u8[262144]{0}', space=vmem, size = 0x40000, scoped, tag = 'input window, operand 2, single buffered']
    #allocation8 [shape = 's32[1]{0}', space=sflag, size = 0x4, scoped, tag = 'scoped memory for logits_forward.1']
    #allocation9 [shape = 'u8[524288]{0}', space=vmem, size = 0x80000, scoped, tag = 'output window, operand 0']
    %13 = vsyncpa [#allocation5], 0
    %14 = vsyncpa [#allocation3], 0
    %s15 = scalar_lea.sflag [#allocation3], 1
    %16 = vsyncpa %s15, 0
    %17 = vsyncpa [#allocation8], 0
    %18 = vsyncpa [#allocation4], 0
    %s19 = scalar_lea.sflag [#allocation4], 1
    %20 = vsyncpa %s19, 0
    loop: start=0, step=1, limit=4
    $region2: #{logits_forward.1} parent=1 // loop_pre_header
      _
    $region3: #{logits_forward.1} parent=1 // loop_header
      %s22 = sphi 0, %s26
      %p23 = scmp.ge.s32.totalorder %s22, 4
      %s30 = sphi 0, %s30
      %s32 = sphi 0, %s30
      %s33 = sphi 0, %s32
      %s47 = sphi 0, %s33
      %s53 = sphi 0, %s55
      %s56 = sphi 0, %s53
      %s57 = sphi 0, %s56
      %s73 = sphi 0, %s57
      %s77 = sphi 0, %s77
      %s79 = sphi 0, %s77
      %s80 = sphi 0, %s79
      %s94 = sphi 0, %s80
      %s98 = sphi 0, %s98
      %s100 = sphi 0, %s98
      %s101 = sphi 0, %s100
      %s115 = sphi 0, %s101
      %s119 = sphi 0, %s119
      %s121 = sphi 0, %s119
      %s122 = sphi 0, %s121
      %s136 = sphi 0, %s122
      %s140 = sphi 0, %s140
      %s142 = sphi 0, %s140
      %s143 = sphi 0, %s142
      %s157 = sphi 0, %s143
      %s161 = sphi 0, %s161
      %s163 = sphi 0, %s161
      %s164 = sphi 0, %s163
      %s178 = sphi 0, %s164
      %s182 = sphi 0, %s182
      %s184 = sphi 0, %s182
      %s185 = sphi 0, %s184
      %s199 = sphi 0, %s185
      %s205 = sphi 0, %s207
      %s208 = sphi 0, %s205
      %s209 = sphi 0, %s208
      %s225 = sphi 0, %s209
    $region4: #{logits_forward.1} parent=1 // loop_header_branch
      %25 = sbr.rel (%p23) target = $region8
    $region5: #{logits_forward.1} parent=1 // loop_body
      %s27 = ssub.s32 %s22, 1
      %s28 = ssub.s32 %s22, 2
      %s29 = sadd.s32 %s22, 1
      %s31 = sadd.s32 %s30, 1
      %p34 = scmp.eq.s32.totalorder %s22, 1
      %p35 = scmp.ne.s32.totalorder %s30, %s32
      %p36 = scmp.eq.s32.totalorder %s22, 0
      %p37 = por %p35, %p36
      %p38 = scmp.ne.s32.totalorder %s30, %s32
      %p39 = scmp.eq.s32.totalorder %s27, 1
      %p40 = por %p38, %p39
      %p41 = scmp.ne.s32.totalorder %s32, %s33
      %p42 = scmp.eq.s32.totalorder %s27, 0
      %p43 = por %p41, %p42
      %p44 = scmp.ne.s32.totalorder %s32, %s33
      %p45 = scmp.eq.s32.totalorder %s28, 1
      %p46 = por %p44, %p45
      %p48 = scmp.ne.s32.totalorder %s33, %s47
      %p49 = scmp.eq.s32.totalorder %s28, 0
      %p50 = por %p48, %p49
      %s51 = ssub.s32 %s22, %s29
      %p52 = scmp.eq.s32.totalorder %s51, 0
      %s54 = sadd.s32 %s53, 1
      %s55 = scalar_select %p52, %s53, %s54
      %p58 = pneg %p52
      %p59 = scmp.eq.s32.totalorder %s22, 1
      %p60 = por %p58, %p59
      %p61 = scmp.ne.s32.totalorder %s53, %s56
      %p62 = scmp.eq.s32.totalorder %s22, 0
      %p63 = por %p61, %p62
      %p64 = scmp.ne.s32.totalorder %s53, %s56
      %p65 = scmp.eq.s32.totalorder %s27, 1
      %p66 = por %p64, %p65
      %p67 = scmp.ne.s32.totalorder %s56, %s57
      %p68 = scmp.eq.s32.totalorder %s27, 0
      %p69 = por %p67, %p68
      %p70 = scmp.ne.s32.totalorder %s56, %s57
      %p71 = scmp.eq.s32.totalorder %s28, 1
      %p72 = por %p70, %p71
      %p74 = scmp.ne.s32.totalorder %s57, %s73
      %p75 = scmp.eq.s32.totalorder %s28, 0
      %p76 = por %p74, %p75
      %s78 = sadd.s32 %s77, 1
      %p81 = scmp.eq.s32.totalorder %s22, 1
      %p82 = scmp.ne.s32.totalorder %s77, %s79
      %p83 = scmp.eq.s32.totalorder %s22, 0
      %p84 = por %p82, %p83
      %p85 = scmp.ne.s32.totalorder %s77, %s79
      %p86 = scmp.eq.s32.totalorder %s27, 1
      %p87 = por %p85, %p86
      %p88 = scmp.ne.s32.totalorder %s79, %s80
      %p89 = scmp.eq.s32.totalorder %s27, 0
      %p90 = por %p88, %p89
      %p91 = scmp.ne.s32.totalorder %s79, %s80
      %p92 = scmp.eq.s32.totalorder %s28, 1
      %p93 = por %p91, %p92
      %p95 = scmp.ne.s32.totalorder %s80, %s94
      %p96 = scmp.eq.s32.totalorder %s28, 0
      %p97 = por %p95, %p96
      %s99 = sadd.s32 %s98, 1
      %p102 = scmp.eq.s32.totalorder %s22, 1
      %p103 = scmp.ne.s32.totalorder %s98, %s100
      %p104 = scmp.eq.s32.totalorder %s22, 0
      %p105 = por %p103, %p104
      %p106 = scmp.ne.s32.totalorder %s98, %s100
      %p107 = scmp.eq.s32.totalorder %s27, 1
      %p108 = por %p106, %p107
      %p109 = scmp.ne.s32.totalorder %s100, %s101
      %p110 = scmp.eq.s32.totalorder %s27, 0
      %p111 = por %p109, %p110
      %p112 = scmp.ne.s32.totalorder %s100, %s101
      %p113 = scmp.eq.s32.totalorder %s28, 1
      %p114 = por %p112, %p113
      %p116 = scmp.ne.s32.totalorder %s101, %s115
      %p117 = scmp.eq.s32.totalorder %s28, 0
      %p118 = por %p116, %p117
      %s120 = sadd.s32 %s119, 1
      %p123 = scmp.eq.s32.totalorder %s22, 1
      %p124 = scmp.ne.s32.totalorder %s119, %s121
      %p125 = scmp.eq.s32.totalorder %s22, 0
      %p126 = por %p124, %p125
      %p127 = scmp.ne.s32.totalorder %s119, %s121
      %p128 = scmp.eq.s32.totalorder %s27, 1
      %p129 = por %p127, %p128
      %p130 = scmp.ne.s32.totalorder %s121, %s122
      %p131 = scmp.eq.s32.totalorder %s27, 0
      %p132 = por %p130, %p131
      %p133 = scmp.ne.s32.totalorder %s121, %s122
      %p134 = scmp.eq.s32.totalorder %s28, 1
      %p135 = por %p133, %p134
      %p137 = scmp.ne.s32.totalorder %s122, %s136
      %p138 = scmp.eq.s32.totalorder %s28, 0
      %p139 = por %p137, %p138
      %s141 = sadd.s32 %s140, 1
      %p144 = scmp.eq.s32.totalorder %s22, 1
      %p145 = scmp.ne.s32.totalorder %s140, %s142
      %p146 = scmp.eq.s32.totalorder %s22, 0
      %p147 = por %p145, %p146
      %p148 = scmp.ne.s32.totalorder %s140, %s142
      %p149 = scmp.eq.s32.totalorder %s27, 1
      %p150 = por %p148, %p149
      %p151 = scmp.ne.s32.totalorder %s142, %s143
      %p152 = scmp.eq.s32.totalorder %s27, 0
      %p153 = por %p151, %p152
      %p154 = scmp.ne.s32.totalorder %s142, %s143
      %p155 = scmp.eq.s32.totalorder %s28, 1
      %p156 = por %p154, %p155
      %p158 = scmp.ne.s32.totalorder %s143, %s157
      %p159 = scmp.eq.s32.totalorder %s28, 0
      %p160 = por %p158, %p159
      %s162 = sadd.s32 %s161, 1
      %p165 = scmp.eq.s32.totalorder %s22, 1
      %p166 = scmp.ne.s32.totalorder %s161, %s163
      %p167 = scmp.eq.s32.totalorder %s22, 0
      %p168 = por %p166, %p167
      %p169 = scmp.ne.s32.totalorder %s161, %s163
      %p170 = scmp.eq.s32.totalorder %s27, 1
      %p171 = por %p169, %p170
      %p172 = scmp.ne.s32.totalorder %s163, %s164
      %p173 = scmp.eq.s32.totalorder %s27, 0
      %p174 = por %p172, %p173
      %p175 = scmp.ne.s32.totalorder %s163, %s164
      %p176 = scmp.eq.s32.totalorder %s28, 1
      %p177 = por %p175, %p176
      %p179 = scmp.ne.s32.totalorder %s164, %s178
      %p180 = scmp.eq.s32.totalorder %s28, 0
      %p181 = por %p179, %p180
      %s183 = sadd.s32 %s182, 1
      %p186 = scmp.eq.s32.totalorder %s22, 1
      %p187 = scmp.ne.s32.totalorder %s182, %s184
      %p188 = scmp.eq.s32.totalorder %s22, 0
      %p189 = por %p187, %p188
      %p190 = scmp.ne.s32.totalorder %s182, %s184
      %p191 = scmp.eq.s32.totalorder %s27, 1
      %p192 = por %p190, %p191
      %p193 = scmp.ne.s32.totalorder %s184, %s185
      %p194 = scmp.eq.s32.totalorder %s27, 0
      %p195 = por %p193, %p194
      %p196 = scmp.ne.s32.totalorder %s184, %s185
      %p197 = scmp.eq.s32.totalorder %s28, 1
      %p198 = por %p196, %p197
      %p200 = scmp.ne.s32.totalorder %s185, %s199
      %p201 = scmp.eq.s32.totalorder %s28, 0
      %p202 = por %p200, %p201
      %s203 = ssub.s32 %s22, %s29
      %p204 = scmp.eq.s32.totalorder %s203, 0
      %s206 = sadd.s32 %s205, 1
      %s207 = scalar_select %p204, %s205, %s206
      %p210 = pneg %p204
      %p211 = scmp.eq.s32.totalorder %s22, 1
      %p212 = por %p210, %p211
      %p213 = scmp.ne.s32.totalorder %s205, %s208
      %p214 = scmp.eq.s32.totalorder %s22, 0
      %p215 = por %p213, %p214
      %p216 = scmp.ne.s32.totalorder %s205, %s208
      %p217 = scmp.eq.s32.totalorder %s27, 1
      %p218 = por %p216, %p217
      %p219 = scmp.ne.s32.totalorder %s208, %s209
      %p220 = scmp.eq.s32.totalorder %s27, 0
      %p221 = por %p219, %p220
      %p222 = scmp.ne.s32.totalorder %s208, %s209
      %p223 = scmp.eq.s32.totalorder %s28, 1
      %p224 = por %p222, %p223
      %p226 = scmp.ne.s32.totalorder %s209, %s225
      %p227 = scmp.eq.s32.totalorder %s28, 0
      %p228 = por %p226, %p227
      %p229 = scmp.le.s32.totalorder 1, %s22
      %p230 = scmp.lt.s32.totalorder %s22, 3
      %p231 = pnand %p229, %p230
      %p232 = pneg %p231
      // Predicated region
      $region9: #{logits_forward.1} parent=5 // pred_check
        _
      $region10: #{logits_forward.1} parent=5 // pred_check_branch
        %234 = sbr.rel (%p231) target = $region12
      $region11: #{logits_forward.1} parent=5 // pred_region
        %s235 = ssub.s32 %s22, 1
        // Predicated region
        $region13: #{logits_forward.1} parent=11 // pred_check
          %p236 = pneg %p43
        $region14: #{logits_forward.1} parent=11 // pred_check_branch
          %238 = sbr.rel (%p236) target = $region16
        $region15: #{logits_forward.1} parent=11 // pred_region
          %240 = vsyncadd [#allocation5], 0
          %s242 = sshll.u32 %s0, 4
          %s243 = int_to_ptr.vmem [resolvable:$true] %s242
          %245 = dma.vmem_to_smem %s243, 16, [#allocation2], [#allocation5]
        $region16: #{logits_forward.1} parent=11 // pred_fallthru
          _
        // Predicated region
        $region17: #{logits_forward.1} parent=11 // pred_check
          %p246 = pneg %p90
        $region18: #{logits_forward.1} parent=11 // pred_check_branch
          %248 = sbr.rel (%p246) target = $region20
        $region19: #{logits_forward.1} parent=11 // pred_region
          %250 = vsyncadd [#allocation8], 0
          %s251 = sshll.u32 %s2, 4
          %s252 = int_to_ptr.hbm [resolvable:$true] %s251
          %s253 = sshll.u32 [#allocation7], 4
          %s254 = int_to_ptr.vmem [resolvable:$true] %s253
          %259 = dma.hbm_to_vmem [thread:$0]  %s252, 8192, %s254, [#allocation8], 256, 256, 16
        $region20: #{logits_forward.1} parent=11 // pred_fallthru
          _
        // Predicated region
        $region21: #{logits_forward.1} parent=11 // pred_check
          %p260 = pneg %p111
        $region22: #{logits_forward.1} parent=11 // pred_check_branch
          %262 = sbr.rel (%p260) target = $region24
        $region23: #{logits_forward.1} parent=11 // pred_region
          _
        $region24: #{logits_forward.1} parent=11 // pred_fallthru
          _
        // Predicated region
        $region25: #{logits_forward.1} parent=11 // pred_check
          %p263 = pneg %p132
        $region26: #{logits_forward.1} parent=11 // pred_check_branch
          %265 = sbr.rel (%p263) target = $region28
        $region27: #{logits_forward.1} parent=11 // pred_region
          _
        $region28: #{logits_forward.1} parent=11 // pred_fallthru
          _
        // Predicated region
        $region29: #{logits_forward.1} parent=11 // pred_check
          %p266 = pneg %p153
        $region30: #{logits_forward.1} parent=11 // pred_check_branch
          %268 = sbr.rel (%p266) target = $region32
        $region31: #{logits_forward.1} parent=11 // pred_region
          _
        $region32: #{logits_forward.1} parent=11 // pred_fallthru
          _
        // Predicated region
        $region33: #{logits_forward.1} parent=11 // pred_check
          %p269 = pneg %p174
        $region34: #{logits_forward.1} parent=11 // pred_check_branch
          %271 = sbr.rel (%p269) target = $region36
        $region35: #{logits_forward.1} parent=11 // pred_region
          _
        $region36: #{logits_forward.1} parent=11 // pred_fallthru
          _
        // Predicated region
        $region37: #{logits_forward.1} parent=11 // pred_check
          %p272 = pneg %p195
        $region38: #{logits_forward.1} parent=11 // pred_check_branch
          %274 = sbr.rel (%p272) target = $region40
        $region39: #{logits_forward.1} parent=11 // pred_region
          _
        $region40: #{logits_forward.1} parent=11 // pred_fallthru
          _
      $region12: #{logits_forward.1} parent=5 // pred_fallthru
        _
      %p275 = scmp.lt.s32.totalorder %s22, 2
      // Predicated region
      $region41: #{logits_forward.1} parent=5 // pred_check
        %p276 = pneg %p275
      $region42: #{logits_forward.1} parent=5 // pred_check_branch
        %278 = sbr.rel (%p276) target = $region44
      $region43: #{logits_forward.1} parent=5 // pred_region
        // Predicated region
        $region45: #{logits_forward.1} parent=43 // pred_check
          %p279 = pneg %p63
        $region46: #{logits_forward.1} parent=43 // pred_check_branch
          %281 = sbr.rel (%p279) target = $region48
        $region47: #{logits_forward.1} parent=43 // pred_region
          %s282 = sand.u32 %s53, 1
          %s283 = scalar_lea.sflag [#allocation3], %s282
          %s284 = sand.u32 %s53, 1
          %s285 = smul.addr %s284, 256
          %s286 = scalar_lea.vmem [#allocation6], %s285
          %s287 = smul.u32 16, %s22
          %289 = vsyncadd %s283, 0
          %s290 = smul.addr %s287, 2
          %s291 = smul.addr %s290, 8
          %s292 = scalar_lea.hbm %s1, %s291
          %s293 = sshll.u32 %s292, 4
          %s294 = int_to_ptr.hbm [resolvable:$true] %s293
          %s295 = sshll.u32 %s286, 4
          %s296 = int_to_ptr.vmem [resolvable:$true] %s295
          %301 = dma.hbm_to_vmem [thread:$0]  %s294, 4096, %s296, %s283, 256, 256, 16
        $region48: #{logits_forward.1} parent=43 // pred_fallthru
          _
      $region44: #{logits_forward.1} parent=5 // pred_fallthru
        _
      %p302 = scmp.le.s32.totalorder 1, %s22
      %p303 = scmp.lt.s32.totalorder %s22, 3
      %p304 = pnand %p302, %p303
      %p305 = pneg %p304
      // Predicated region
      $region49: #{logits_forward.1} parent=5 // pred_check
        _
      $region50: #{logits_forward.1} parent=5 // pred_check_branch
        %307 = sbr.rel (%p304) target = $region52
      $region51: #{logits_forward.1} parent=5 // pred_region
        %s308 = ssub.s32 %s22, 1
        // Predicated region
        $region53: #{logits_forward.1} parent=51 // pred_check
          %p309 = pneg %p43
        $region54: #{logits_forward.1} parent=51 // pred_check_branch
          %311 = sbr.rel (%p309) target = $region56
        $region55: #{logits_forward.1} parent=51 // pred_region
          %313 = dma.done [#allocation5], 16
        $region56: #{logits_forward.1} parent=51 // pred_fallthru
          _
        %s314 = sand.u32 %s56, 1
        %s315 = scalar_lea.sflag [#allocation3], %s314
        %s316 = sand.u32 %s56, 1
        %s317 = smul.addr %s316, 256
        %s318 = scalar_lea.vmem [#allocation6], %s317
        // Predicated region
        $region57: #{logits_forward.1} parent=51 // pred_check
          %p319 = pneg %p69
        $region58: #{logits_forward.1} parent=51 // pred_check_branch
          %321 = sbr.rel (%p319) target = $region60
        $region59: #{logits_forward.1} parent=51 // pred_region
          %323 = dma.done %s315, 4096
        $region60: #{logits_forward.1} parent=51 // pred_fallthru
          _
        // Predicated region
        $region61: #{logits_forward.1} parent=51 // pred_check
          %p324 = pneg %p90
        $region62: #{logits_forward.1} parent=51 // pred_check_branch
          %326 = sbr.rel (%p324) target = $region64
        $region63: #{logits_forward.1} parent=51 // pred_region
          %328 = dma.done [#allocation8], 8192
        $region64: #{logits_forward.1} parent=51 // pred_fallthru
          _
        %329 = sfence
        %p330 = pneg %p43
        %p331 = pneg %p40
        %s332 = sand.u32 %s56, 1
        %s333 = scalar_lea.sflag [#allocation3], %s332
        %s334 = sand.u32 %s56, 1
        %s335 = smul.addr %s334, 256
        %s336 = scalar_lea.vmem [#allocation6], %s335
        %p337 = pneg %p69
        %p338 = pneg %p66
        %p339 = pneg %p90
        %p340 = pneg %p87
        %p341 = pneg %p111
        %p342 = pneg %p108
        %p343 = pneg %p132
        %p344 = pneg %p129
        %p345 = pneg %p153
        %p346 = pneg %p150
        %p347 = pneg %p174
        %p348 = pneg %p171
        %p349 = pneg %p195
        %p350 = pneg %p192
        %p351 = pneg %p221
        %p352 = pneg %p218
        %s353 = sand.u32 %s208, 1
        %s354 = scalar_lea.sflag [#allocation4], %s353
        %s355 = sand.u32 %s208, 1
        %s356 = smul.addr %s355, 512
        %s357 = scalar_lea.vmem [#allocation9], %s356
        %s358 = smul.u32 16, %s27
        %s359 = smul.u32 16, %s27
        %v360 = vld [vmem:[%s318] sm:$0xff]
        %v361 = vld [vmem:[%s318 + $0x8] sm:$0xff]
        %v362 = vld [vmem:[%s318 + $0x10] sm:$0xff]
        %v363 = vld [vmem:[%s318 + $0x18] sm:$0xff]
        %v364 = vld [vmem:[%s318 + $0x20] sm:$0xff]
        %v365 = vld [vmem:[%s318 + $0x28] sm:$0xff]
        %v366 = vld [vmem:[%s318 + $0x30] sm:$0xff]
        %v367 = vld [vmem:[%s318 + $0x38] sm:$0xff]
        %v368 = vld [vmem:[%s318 + $0x40] sm:$0xff]
        %v369 = vld [vmem:[%s318 + $0x48] sm:$0xff]
        %v370 = vld [vmem:[%s318 + $0x50] sm:$0xff]
        %v371 = vld [vmem:[%s318 + $0x58] sm:$0xff]
        %v372 = vld [vmem:[%s318 + $0x60] sm:$0xff]
        %v373 = vld [vmem:[%s318 + $0x68] sm:$0xff]
        %v374 = vld [vmem:[%s318 + $0x70] sm:$0xff]
        %v375 = vld [vmem:[%s318 + $0x78] sm:$0xff]
        %v376 = vld [vmem:[%s318 + $0x80] sm:$0xff]
        %v377 = vld [vmem:[%s318 + $0x88] sm:$0xff]
        %v378 = vld [vmem:[%s318 + $0x90] sm:$0xff]
        %v379 = vld [vmem:[%s318 + $0x98] sm:$0xff]
        %v380 = vld [vmem:[%s318 + $0xa0] sm:$0xff]
        %v381 = vld [vmem:[%s318 + $0xa8] sm:$0xff]
        %v382 = vld [vmem:[%s318 + $0xb0] sm:$0xff]
        %v383 = vld [vmem:[%s318 + $0xb8] sm:$0xff]
        %v384 = vld [vmem:[%s318 + $0xc0] sm:$0xff]
        %v385 = vld [vmem:[%s318 + $0xc8] sm:$0xff]
        %v386 = vld [vmem:[%s318 + $0xd0] sm:$0xff]
        %v387 = vld [vmem:[%s318 + $0xd8] sm:$0xff]
        %v388 = vld [vmem:[%s318 + $0xe0] sm:$0xff]
        %v389 = vld [vmem:[%s318 + $0xe8] sm:$0xff]
        %v390 = vld [vmem:[%s318 + $0xf0] sm:$0xff]
        %v391 = vld [vmem:[%s318 + $0xf8] sm:$0xff]
        %s392 = sld [smem:[#allocation2]]
        %s393 = sld [smem:[#allocation2 + $0x1]]
        %v394 = vadd.f32 %v360, %v361
        %395 = vadd.xlane.f32.xlu0 %v394
        %v396 = vpop.xlane.xlu0 %395
        %v397 = vadd.f32 %v362, %v363
        %398 = vadd.xlane.f32.xlu0 %v397
        %v399 = vpop.xlane.xlu0 %398
        %v400 = vadd.f32 %v364, %v365
        %401 = vadd.xlane.f32.xlu0 %v400
        %v402 = vpop.xlane.xlu0 %401
        %v403 = vadd.f32 %v366, %v367
        %404 = vadd.xlane.f32.xlu0 %v403
        %v405 = vpop.xlane.xlu0 %404
        %v406 = vadd.f32 %v368, %v369
        %407 = vadd.xlane.f32.xlu0 %v406
        %v408 = vpop.xlane.xlu0 %407
        %v409 = vadd.f32 %v370, %v371
        %410 = vadd.xlane.f32.xlu0 %v409
        %v411 = vpop.xlane.xlu0 %410
        %v412 = vadd.f32 %v372, %v373
        %413 = vadd.xlane.f32.xlu0 %v412
        %v414 = vpop.xlane.xlu0 %413
        %v415 = vadd.f32 %v374, %v375
        %416 = vadd.xlane.f32.xlu0 %v415
        %v417 = vpop.xlane.xlu0 %416
        %v418 = vadd.f32 %v376, %v377
        %419 = vadd.xlane.f32.xlu0 %v418
        %v420 = vpop.xlane.xlu0 %419
        %v421 = vadd.f32 %v378, %v379
        %422 = vadd.xlane.f32.xlu0 %v421
        %v423 = vpop.xlane.xlu0 %422
        %v424 = vadd.f32 %v380, %v381
        %425 = vadd.xlane.f32.xlu0 %v424
        %v426 = vpop.xlane.xlu0 %425
        %v427 = vadd.f32 %v382, %v383
        %428 = vadd.xlane.f32.xlu0 %v427
        %v429 = vpop.xlane.xlu0 %428
        %v430 = vadd.f32 %v384, %v385
        %431 = vadd.xlane.f32.xlu0 %v430
        %v432 = vpop.xlane.xlu0 %431
        %v433 = vadd.f32 %v386, %v387
        %434 = vadd.xlane.f32.xlu0 %v433
        %v435 = vpop.xlane.xlu0 %434
        %v436 = vadd.f32 %v388, %v389
        %437 = vadd.xlane.f32.xlu0 %v436
        %v438 = vpop.xlane.xlu0 %437
        %v439 = vadd.f32 %v390, %v391
        %440 = vadd.xlane.f32.xlu0 %v439
        %v441 = vpop.xlane.xlu0 %440
        %v442 = vmul.f32 %v360, %v360
        %v443 = vmul.f32 %v361, %v361
        %v444 = vmul.f32 %v362, %v362
        %v445 = vmul.f32 %v363, %v363
        %v446 = vmul.f32 %v364, %v364
        %v447 = vmul.f32 %v365, %v365
        %v448 = vmul.f32 %v366, %v366
        %v449 = vmul.f32 %v367, %v367
        %v450 = vmul.f32 %v368, %v368
        %v451 = vmul.f32 %v369, %v369
        %v452 = vmul.f32 %v370, %v370
        %v453 = vmul.f32 %v371, %v371
        %v454 = vmul.f32 %v372, %v372
        %v455 = vmul.f32 %v373, %v373
        %v456 = vmul.f32 %v374, %v374
        %v457 = vmul.f32 %v375, %v375
        %v458 = vmul.f32 %v376, %v376
        %v459 = vmul.f32 %v377, %v377
        %v460 = vmul.f32 %v378, %v378
        %v461 = vmul.f32 %v379, %v379
        %v462 = vmul.f32 %v380, %v380
        %v463 = vmul.f32 %v381, %v381
        %v464 = vmul.f32 %v382, %v382
        %v465 = vmul.f32 %v383, %v383
        %v466 = vmul.f32 %v384, %v384
        %v467 = vmul.f32 %v385, %v385
        %v468 = vmul.f32 %v386, %v386
        %v469 = vmul.f32 %v387, %v387
        %v470 = vmul.f32 %v388, %v388
        %v471 = vmul.f32 %v389, %v389
        %v472 = vmul.f32 %v390, %v390
        %v473 = vmul.f32 %v391, %v391
        %v474 = vadd.f32 %v442, %v443
        %475 = vadd.xlane.f32.xlu0 %v474
        %v476 = vpop.xlane.xlu0 %475
        %v477 = vadd.f32 %v444, %v445
        %478 = vadd.xlane.f32.xlu0 %v477
        %v479 = vpop.xlane.xlu0 %478
        %v480 = vadd.f32 %v446, %v447
        %481 = vadd.xlane.f32.xlu0 %v480
        %v482 = vpop.xlane.xlu0 %481
        %v483 = vadd.f32 %v448, %v449
        %484 = vadd.xlane.f32.xlu0 %v483
        %v485 = vpop.xlane.xlu0 %484
        %v486 = vadd.f32 %v450, %v451
        %487 = vadd.xlane.f32.xlu0 %v486
        %v488 = vpop.xlane.xlu0 %487
        %v489 = vadd.f32 %v452, %v453
        %490 = vadd.xlane.f32.xlu0 %v489
        %v491 = vpop.xlane.xlu0 %490
        %v492 = vadd.f32 %v454, %v455
        %493 = vadd.xlane.f32.xlu0 %v492
        %v494 = vpop.xlane.xlu0 %493
        %v495 = vadd.f32 %v456, %v457
        %496 = vadd.xlane.f32.xlu0 %v495
        %v497 = vpop.xlane.xlu0 %496
        %v498 = vadd.f32 %v458, %v459
        %499 = vadd.xlane.f32.xlu0 %v498
        %v500 = vpop.xlane.xlu0 %499
        %v501 = vadd.f32 %v460, %v461
        %502 = vadd.xlane.f32.xlu0 %v501
        %v503 = vpop.xlane.xlu0 %502
        %v504 = vadd.f32 %v462, %v463
        %505 = vadd.xlane.f32.xlu0 %v504
        %v506 = vpop.xlane.xlu0 %505
        %v507 = vadd.f32 %v464, %v465
        %508 = vadd.xlane.f32.xlu0 %v507
        %v509 = vpop.xlane.xlu0 %508
        %v510 = vadd.f32 %v466, %v467
        %511 = vadd.xlane.f32.xlu0 %v510
        %v512 = vpop.xlane.xlu0 %511
        %v513 = vadd.f32 %v468, %v469
        %514 = vadd.xlane.f32.xlu0 %v513
        %v515 = vpop.xlane.xlu0 %514
        %v516 = vadd.f32 %v470, %v471
        %517 = vadd.xlane.f32.xlu0 %v516
        %v518 = vpop.xlane.xlu0 %517
        %v519 = vadd.f32 %v472, %v473
        %520 = vadd.xlane.f32.xlu0 %v519
        %v521 = vpop.xlane.xlu0 %520
        %v522 = vmul.f32 %v396, 0.00390625
        %v523 = vmul.f32 %v399, 0.00390625
        %v524 = vmul.f32 %v402, 0.00390625
        %v525 = vmul.f32 %v405, 0.00390625
        %v526 = vmul.f32 %v408, 0.00390625
        %v527 = vmul.f32 %v411, 0.00390625
        %v528 = vmul.f32 %v414, 0.00390625
        %v529 = vmul.f32 %v417, 0.00390625
        %v530 = vmul.f32 %v420, 0.00390625
        %v531 = vmul.f32 %v423, 0.00390625
        %v532 = vmul.f32 %v426, 0.00390625
        %v533 = vmul.f32 %v429, 0.00390625
        %v534 = vmul.f32 %v432, 0.00390625
        %v535 = vmul.f32 %v435, 0.00390625
        %v536 = vmul.f32 %v438, 0.00390625
        %v537 = vmul.f32 %v441, 0.00390625
        %v538 = vmul.f32 %v476, 0.00390625
        %v539 = vmul.f32 %v479, 0.00390625
        %v540 = vmul.f32 %v482, 0.00390625
        %v541 = vmul.f32 %v485, 0.00390625
        %v542 = vmul.f32 %v488, 0.00390625
        %v543 = vmul.f32 %v491, 0.00390625
        %v544 = vmul.f32 %v494, 0.00390625
        %v545 = vmul.f32 %v497, 0.00390625
        %v546 = vmul.f32 %v500, 0.00390625
        %v547 = vmul.f32 %v503, 0.00390625
        %v548 = vmul.f32 %v506, 0.00390625
        %v549 = vmul.f32 %v509, 0.00390625
        %v550 = vmul.f32 %v512, 0.00390625
        %v551 = vmul.f32 %v515, 0.00390625
        %v552 = vmul.f32 %v518, 0.00390625
        %v553 = vmul.f32 %v521, 0.00390625
        %v554 = vmul.f32 %v522, %v522
        %v555 = vmul.f32 %v523, %v523
        %v556 = vmul.f32 %v524, %v524
        %v557 = vmul.f32 %v525, %v525
        %v558 = vmul.f32 %v526, %v526
        %v559 = vmul.f32 %v527, %v527
        %v560 = vmul.f32 %v528, %v528
        %v561 = vmul.f32 %v529, %v529
        %v562 = vmul.f32 %v530, %v530
        %v563 = vmul.f32 %v531, %v531
        %v564 = vmul.f32 %v532, %v532
        %v565 = vmul.f32 %v533, %v533
        %v566 = vmul.f32 %v534, %v534
        %v567 = vmul.f32 %v535, %v535
        %v568 = vmul.f32 %v536, %v536
        %v569 = vmul.f32 %v537, %v537
        %v570 = vsub.f32 %v538, %v554
        %v571 = vsub.f32 %v539, %v555
        %v572 = vsub.f32 %v540, %v556
        %v573 = vsub.f32 %v541, %v557
        %v574 = vsub.f32 %v542, %v558
        %v575 = vsub.f32 %v543, %v559
        %v576 = vsub.f32 %v544, %v560
        %v577 = vsub.f32 %v545, %v561
        %v578 = vsub.f32 %v546, %v562
        %v579 = vsub.f32 %v547, %v563
        %v580 = vsub.f32 %v548, %v564
        %v581 = vsub.f32 %v549, %v565
        %v582 = vsub.f32 %v550, %v566
        %v583 = vsub.f32 %v551, %v567
        %v584 = vsub.f32 %v552, %v568
        %v585 = vsub.f32 %v553, %v569
        %v586 = vmax.f32 %v570, 0.0
        %v587 = vmax.f32 %v571, 0.0
        %v588 = vmax.f32 %v572, 0.0
        %v589 = vmax.f32 %v573, 0.0
        %v590 = vmax.f32 %v574, 0.0
        %v591 = vmax.f32 %v575, 0.0
        %v592 = vmax.f32 %v576, 0.0
        %v593 = vmax.f32 %v577, 0.0
        %v594 = vmax.f32 %v578, 0.0
        %v595 = vmax.f32 %v579, 0.0
        %v596 = vmax.f32 %v580, 0.0
        %v597 = vmax.f32 %v581, 0.0
        %v598 = vmax.f32 %v582, 0.0
        %v599 = vmax.f32 %v583, 0.0
        %v600 = vmax.f32 %v584, 0.0
        %v601 = vmax.f32 %v585, 0.0
        %v602 = vsub.f32 %v360, %v522
        %v603 = vsub.f32 %v361, %v522
        %v604 = vsub.f32 %v362, %v523
        %v605 = vsub.f32 %v363, %v523
        %v606 = vsub.f32 %v364, %v524
        %v607 = vsub.f32 %v365, %v524
        %v608 = vsub.f32 %v366, %v525
        %v609 = vsub.f32 %v367, %v525
        %v610 = vsub.f32 %v368, %v526
        %v611 = vsub.f32 %v369, %v526
        %v612 = vsub.f32 %v370, %v527
        %v613 = vsub.f32 %v371, %v527
        %v614 = vsub.f32 %v372, %v528
        %v615 = vsub.f32 %v373, %v528
        %v616 = vsub.f32 %v374, %v529
        %v617 = vsub.f32 %v375, %v529
        %v618 = vsub.f32 %v376, %v530
        %v619 = vsub.f32 %v377, %v530
        %v620 = vsub.f32 %v378, %v531
        %v621 = vsub.f32 %v379, %v531
        %v622 = vsub.f32 %v380, %v532
        %v623 = vsub.f32 %v381, %v532
        %v624 = vsub.f32 %v382, %v533
        %v625 = vsub.f32 %v383, %v533
        %v626 = vsub.f32 %v384, %v534
        %v627 = vsub.f32 %v385, %v534
        %v628 = vsub.f32 %v386, %v535
        %v629 = vsub.f32 %v387, %v535
        %v630 = vsub.f32 %v388, %v536
        %v631 = vsub.f32 %v389, %v536
        %v632 = vsub.f32 %v390, %v537
        %v633 = vsub.f32 %v391, %v537
        %v634 = vadd.f32 %v586, 1e-05
        %v635 = vadd.f32 %v587, 1e-05
        %v636 = vadd.f32 %v588, 1e-05
        %v637 = vadd.f32 %v589, 1e-05
        %v638 = vadd.f32 %v590, 1e-05
        %v639 = vadd.f32 %v591, 1e-05
        %v640 = vadd.f32 %v592, 1e-05
        %v641 = vadd.f32 %v593, 1e-05
        %v642 = vadd.f32 %v594, 1e-05
        %v643 = vadd.f32 %v595, 1e-05
        %v644 = vadd.f32 %v596, 1e-05
        %v645 = vadd.f32 %v597, 1e-05
        %v646 = vadd.f32 %v598, 1e-05
        %v647 = vadd.f32 %v599, 1e-05
        %v648 = vadd.f32 %v600, 1e-05
        %v649 = vadd.f32 %v601, 1e-05
        %v650 = vrsqrt.pop %v634
        %v651 = vmul.f32 %v650, %v634
        %v652 = vmul.f32 %v651, %v650
        %v653 = vmul.f32 0.5, %v652
        %v654 = vsub.f32 1.5, %v653
        %v655 = vmul.f32 %v650, %v654
        %vm656 = vweird.f32 %v634
        %vm657 = vweird.f32 %v650
        %vm658 = vmor %vm656, %vm657
        %v659 = vsel %vm658, %v650, %v655
        %v660 = vrsqrt.pop %v635
        %v661 = vmul.f32 %v660, %v635
        %v662 = vmul.f32 %v661, %v660
        %v663 = vmul.f32 0.5, %v662
        %v664 = vsub.f32 1.5, %v663
        %v665 = vmul.f32 %v660, %v664
        %vm666 = vweird.f32 %v635
        %vm667 = vweird.f32 %v660
        %vm668 = vmor %vm666, %vm667
        %v669 = vsel %vm668, %v660, %v665
        %v670 = vrsqrt.pop %v636
        %v671 = vmul.f32 %v670, %v636
        %v672 = vmul.f32 %v671, %v670
        %v673 = vmul.f32 0.5, %v672
        %v674 = vsub.f32 1.5, %v673
        %v675 = vmul.f32 %v670, %v674
        %vm676 = vweird.f32 %v636
        %vm677 = vweird.f32 %v670
        %vm678 = vmor %vm676, %vm677
        %v679 = vsel %vm678, %v670, %v675
        %v680 = vrsqrt.pop %v637
        %v681 = vmul.f32 %v680, %v637
        %v682 = vmul.f32 %v681, %v680
        %v683 = vmul.f32 0.5, %v682
        %v684 = vsub.f32 1.5, %v683
        %v685 = vmul.f32 %v680, %v684
        %vm686 = vweird.f32 %v637
        %vm687 = vweird.f32 %v680
        %vm688 = vmor %vm686, %vm687
        %v689 = vsel %vm688, %v680, %v685
        %v690 = vrsqrt.pop %v638
        %v691 = vmul.f32 %v690, %v638
        %v692 = vmul.f32 %v691, %v690
        %v693 = vmul.f32 0.5, %v692
        %v694 = vsub.f32 1.5, %v693
        %v695 = vmul.f32 %v690, %v694
        %vm696 = vweird.f32 %v638
        %vm697 = vweird.f32 %v690
        %vm698 = vmor %vm696, %vm697
        %v699 = vsel %vm698, %v690, %v695
        %v700 = vrsqrt.pop %v639
        %v701 = vmul.f32 %v700, %v639
        %v702 = vmul.f32 %v701, %v700
        %v703 = vmul.f32 0.5, %v702
        %v704 = vsub.f32 1.5, %v703
        %v705 = vmul.f32 %v700, %v704
        %vm706 = vweird.f32 %v639
        %vm707 = vweird.f32 %v700
        %vm708 = vmor %vm706, %vm707
        %v709 = vsel %vm708, %v700, %v705
        %v710 = vrsqrt.pop %v640
        %v711 = vmul.f32 %v710, %v640
        %v712 = vmul.f32 %v711, %v710
        %v713 = vmul.f32 0.5, %v712
        %v714 = vsub.f32 1.5, %v713
        %v715 = vmul.f32 %v710, %v714
        %vm716 = vweird.f32 %v640
        %vm717 = vweird.f32 %v710
        %vm718 = vmor %vm716, %vm717
        %v719 = vsel %vm718, %v710, %v715
        %v720 = vrsqrt.pop %v641
        %v721 = vmul.f32 %v720, %v641
        %v722 = vmul.f32 %v721, %v720
        %v723 = vmul.f32 0.5, %v722
        %v724 = vsub.f32 1.5, %v723
        %v725 = vmul.f32 %v720, %v724
        %vm726 = vweird.f32 %v641
        %vm727 = vweird.f32 %v720
        %vm728 = vmor %vm726, %vm727
        %v729 = vsel %vm728, %v720, %v725
        %v730 = vrsqrt.pop %v642
        %v731 = vmul.f32 %v730, %v642
        %v732 = vmul.f32 %v731, %v730
        %v733 = vmul.f32 0.5, %v732
        %v734 = vsub.f32 1.5, %v733
        %v735 = vmul.f32 %v730, %v734
        %vm736 = vweird.f32 %v642
        %vm737 = vweird.f32 %v730
        %vm738 = vmor %vm736, %vm737
        %v739 = vsel %vm738, %v730, %v735
        %v740 = vrsqrt.pop %v643
        %v741 = vmul.f32 %v740, %v643
        %v742 = vmul.f32 %v741, %v740
        %v743 = vmul.f32 0.5, %v742
        %v744 = vsub.f32 1.5, %v743
        %v745 = vmul.f32 %v740, %v744
        %vm746 = vweird.f32 %v643
        %vm747 = vweird.f32 %v740
        %vm748 = vmor %vm746, %vm747
        %v749 = vsel %vm748, %v740, %v745
        %v750 = vrsqrt.pop %v644
        %v751 = vmul.f32 %v750, %v644
        %v752 = vmul.f32 %v751, %v750
        %v753 = vmul.f32 0.5, %v752
        %v754 = vsub.f32 1.5, %v753
        %v755 = vmul.f32 %v750, %v754
        %vm756 = vweird.f32 %v644
        %vm757 = vweird.f32 %v750
        %vm758 = vmor %vm756, %vm757
        %v759 = vsel %vm758, %v750, %v755
        %v760 = vrsqrt.pop %v645
        %v761 = vmul.f32 %v760, %v645
        %v762 = vmul.f32 %v761, %v760
        %v763 = vmul.f32 0.5, %v762
        %v764 = vsub.f32 1.5, %v763
        %v765 = vmul.f32 %v760, %v764
        %vm766 = vweird.f32 %v645
        %vm767 = vweird.f32 %v760
        %vm768 = vmor %vm766, %vm767
        %v769 = vsel %vm768, %v760, %v765
        %v770 = vrsqrt.pop %v646
        %v771 = vmul.f32 %v770, %v646
        %v772 = vmul.f32 %v771, %v770
        %v773 = vmul.f32 0.5, %v772
        %v774 = vsub.f32 1.5, %v773
        %v775 = vmul.f32 %v770, %v774
        %vm776 = vweird.f32 %v646
        %vm777 = vweird.f32 %v770
        %vm778 = vmor %vm776, %vm777
        %v779 = vsel %vm778, %v770, %v775
        %v780 = vrsqrt.pop %v647
        %v781 = vmul.f32 %v780, %v647
        %v782 = vmul.f32 %v781, %v780
        %v783 = vmul.f32 0.5, %v782
        %v784 = vsub.f32 1.5, %v783
        %v785 = vmul.f32 %v780, %v784
        %vm786 = vweird.f32 %v647
        %vm787 = vweird.f32 %v780
        %vm788 = vmor %vm786, %vm787
        %v789 = vsel %vm788, %v780, %v785
        %v790 = vrsqrt.pop %v648
        %v791 = vmul.f32 %v790, %v648
        %v792 = vmul.f32 %v791, %v790
        %v793 = vmul.f32 0.5, %v792
        %v794 = vsub.f32 1.5, %v793
        %v795 = vmul.f32 %v790, %v794
        %vm796 = vweird.f32 %v648
        %vm797 = vweird.f32 %v790
        %vm798 = vmor %vm796, %vm797
        %v799 = vsel %vm798, %v790, %v795
        %v800 = vrsqrt.pop %v649
        %v801 = vmul.f32 %v800, %v649
        %v802 = vmul.f32 %v801, %v800
        %v803 = vmul.f32 0.5, %v802
        %v804 = vsub.f32 1.5, %v803
        %v805 = vmul.f32 %v800, %v804
        %vm806 = vweird.f32 %v649
        %vm807 = vweird.f32 %v800
        %vm808 = vmor %vm806, %vm807
        %v809 = vsel %vm808, %v800, %v805
        %v810 = vmul.f32 %v602, %v659
        %v811 = vmul.f32 %v603, %v659
        %v812 = vmul.f32 %v604, %v669
        %v813 = vmul.f32 %v605, %v669
        %v814 = vmul.f32 %v606, %v679
        %v815 = vmul.f32 %v607, %v679
        %v816 = vmul.f32 %v608, %v689
        %v817 = vmul.f32 %v609, %v689
        %v818 = vmul.f32 %v610, %v699
        %v819 = vmul.f32 %v611, %v699
        %v820 = vmul.f32 %v612, %v709
        %v821 = vmul.f32 %v613, %v709
        %v822 = vmul.f32 %v614, %v719
        %v823 = vmul.f32 %v615, %v719
        %v824 = vmul.f32 %v616, %v729
        %v825 = vmul.f32 %v617, %v729
        %v826 = vmul.f32 %v618, %v739
        %v827 = vmul.f32 %v619, %v739
        %v828 = vmul.f32 %v620, %v749
        %v829 = vmul.f32 %v621, %v749
        %v830 = vmul.f32 %v622, %v759
        %v831 = vmul.f32 %v623, %v759
        %v832 = vmul.f32 %v624, %v769
        %v833 = vmul.f32 %v625, %v769
        %v834 = vmul.f32 %v626, %v779
        %v835 = vmul.f32 %v627, %v779
        %v836 = vmul.f32 %v628, %v789
        %v837 = vmul.f32 %v629, %v789
        %v838 = vmul.f32 %v630, %v799
        %v839 = vmul.f32 %v631, %v799
        %v840 = vmul.f32 %v632, %v809
        %v841 = vmul.f32 %v633, %v809
        %v842 = vld [vmem:[%s4] sm:$0x3]
        %v844 = vperm.slane %v842, 0
        %v845 = vperm.slane %v842, 1
        %v848 = vmul.f32 %v810, %v844
        %v849 = vmul.f32 %v811, %v845
        %v850 = vmul.f32 %v812, %v844
        %v851 = vmul.f32 %v813, %v845
        %v852 = vmul.f32 %v814, %v844
        %v853 = vmul.f32 %v815, %v845
        %v854 = vmul.f32 %v816, %v844
        %v855 = vmul.f32 %v817, %v845
        %v856 = vmul.f32 %v818, %v844
        %v857 = vmul.f32 %v819, %v845
        %v858 = vmul.f32 %v820, %v844
        %v859 = vmul.f32 %v821, %v845
        %v860 = vmul.f32 %v822, %v844
        %v861 = vmul.f32 %v823, %v845
        %v862 = vmul.f32 %v824, %v844
        %v863 = vmul.f32 %v825, %v845
        %v864 = vmul.f32 %v826, %v844
        %v865 = vmul.f32 %v827, %v845
        %v866 = vmul.f32 %v828, %v844
        %v867 = vmul.f32 %v829, %v845
        %v868 = vmul.f32 %v830, %v844
        %v869 = vmul.f32 %v831, %v845
        %v870 = vmul.f32 %v832, %v844
        %v871 = vmul.f32 %v833, %v845
        %v872 = vmul.f32 %v834, %v844
        %v873 = vmul.f32 %v835, %v845
        %v874 = vmul.f32 %v836, %v844
        %v875 = vmul.f32 %v837, %v845
        %v876 = vmul.f32 %v838, %v844
        %v877 = vmul.f32 %v839, %v845
        %v878 = vmul.f32 %v840, %v844
        %v879 = vmul.f32 %v841, %v845
        %v880 = vld [vmem:[%s5] sm:$0x3]
        %v882 = vperm.slane %v880, 0
        %v883 = vperm.slane %v880, 1
        %v886 = vadd.f32 %v848, %v882
        %v887 = vadd.f32 %v849, %v883
        %v888 = vadd.f32 %v850, %v882
        %v889 = vadd.f32 %v851, %v883
        %v890 = vadd.f32 %v852, %v882
        %v891 = vadd.f32 %v853, %v883
        %v892 = vadd.f32 %v854, %v882
        %v893 = vadd.f32 %v855, %v883
        %v894 = vadd.f32 %v856, %v882
        %v895 = vadd.f32 %v857, %v883
        %v896 = vadd.f32 %v858, %v882
        %v897 = vadd.f32 %v859, %v883
        %v898 = vadd.f32 %v860, %v882
        %v899 = vadd.f32 %v861, %v883
        %v900 = vadd.f32 %v862, %v882
        %v901 = vadd.f32 %v863, %v883
        %v902 = vadd.f32 %v864, %v882
        %v903 = vadd.f32 %v865, %v883
        %v904 = vadd.f32 %v866, %v882
        %v905 = vadd.f32 %v867, %v883
        %v906 = vadd.f32 %v868, %v882
        %v907 = vadd.f32 %v869, %v883
        %v908 = vadd.f32 %v870, %v882
        %v909 = vadd.f32 %v871, %v883
        %v910 = vadd.f32 %v872, %v882
        %v911 = vadd.f32 %v873, %v883
        %v912 = vadd.f32 %v874, %v882
        %v913 = vadd.f32 %v875, %v883
        %v914 = vadd.f32 %v876, %v882
        %v915 = vadd.f32 %v877, %v883
        %v916 = vadd.f32 %v878, %v882
        %v917 = vadd.f32 %v879, %v883
        %v918 = vstv %s392
        %v919 = vmul.f32 %v360, %v918
        %v920 = vmul.f32 %v361, %v918
        %v921 = vmul.f32 %v362, %v918
        %v922 = vmul.f32 %v363, %v918
        %v923 = vmul.f32 %v364, %v918
        %v924 = vmul.f32 %v365, %v918
        %v925 = vmul.f32 %v366, %v918
        %v926 = vmul.f32 %v367, %v918
        %v927 = vmul.f32 %v368, %v918
        %v928 = vmul.f32 %v369, %v918
        %v929 = vmul.f32 %v370, %v918
        %v930 = vmul.f32 %v371, %v918
        %v931 = vmul.f32 %v372, %v918
        %v932 = vmul.f32 %v373, %v918
        %v933 = vmul.f32 %v374, %v918
        %v934 = vmul.f32 %v375, %v918
        %v935 = vmul.f32 %v376, %v918
        %v936 = vmul.f32 %v377, %v918
        %v937 = vmul.f32 %v378, %v918
        %v938 = vmul.f32 %v379, %v918
        %v939 = vmul.f32 %v380, %v918
        %v940 = vmul.f32 %v381, %v918
        %v941 = vmul.f32 %v382, %v918
        %v942 = vmul.f32 %v383, %v918
        %v943 = vmul.f32 %v384, %v918
        %v944 = vmul.f32 %v385, %v918
        %v945 = vmul.f32 %v386, %v918
        %v946 = vmul.f32 %v387, %v918
        %v947 = vmul.f32 %v388, %v918
        %v948 = vmul.f32 %v389, %v918
        %v949 = vmul.f32 %v390, %v918
        %v950 = vmul.f32 %v391, %v918
        %v951 = vadd.f32 %v919, %v886
        %v952 = vadd.f32 %v920, %v887
        %v953 = vadd.f32 %v921, %v888
        %v954 = vadd.f32 %v922, %v889
        %v955 = vadd.f32 %v923, %v890
        %v956 = vadd.f32 %v924, %v891
        %v957 = vadd.f32 %v925, %v892
        %v958 = vadd.f32 %v926, %v893
        %v959 = vadd.f32 %v927, %v894
        %v960 = vadd.f32 %v928, %v895
        %v961 = vadd.f32 %v929, %v896
        %v962 = vadd.f32 %v930, %v897
        %v963 = vadd.f32 %v931, %v898
        %v964 = vadd.f32 %v932, %v899
        %v965 = vadd.f32 %v933, %v900
        %v966 = vadd.f32 %v934, %v901
        %v967 = vadd.f32 %v935, %v902
        %v968 = vadd.f32 %v936, %v903
        %v969 = vadd.f32 %v937, %v904
        %v970 = vadd.f32 %v938, %v905
        %v971 = vadd.f32 %v939, %v906
        %v972 = vadd.f32 %v940, %v907
        %v973 = vadd.f32 %v941, %v908
        %v974 = vadd.f32 %v942, %v909
        %v975 = vadd.f32 %v943, %v910
        %v976 = vadd.f32 %v944, %v911
        %v977 = vadd.f32 %v945, %v912
        %v978 = vadd.f32 %v946, %v913
        %v979 = vadd.f32 %v947, %v914
        %v980 = vadd.f32 %v948, %v915
        %v981 = vadd.f32 %v949, %v916
        %v982 = vadd.f32 %v950, %v917
        %v983 = vmax.f32 %v951, -0.625
        %v984 = vmax.f32 %v952, -0.625
        %v985 = vmax.f32 %v953, -0.625
        %v986 = vmax.f32 %v954, -0.625
        %v987 = vmax.f32 %v955, -0.625
        %v988 = vmax.f32 %v956, -0.625
        %v989 = vmax.f32 %v957, -0.625
        %v990 = vmax.f32 %v958, -0.625
        %v991 = vmax.f32 %v959, -0.625
        %v992 = vmax.f32 %v960, -0.625
        %v993 = vmax.f32 %v961, -0.625
        %v994 = vmax.f32 %v962, -0.625
        %v995 = vmax.f32 %v963, -0.625
        %v996 = vmax.f32 %v964, -0.625
        %v997 = vmax.f32 %v965, -0.625
        %v998 = vmax.f32 %v966, -0.625
        %v999 = vmax.f32 %v967, -0.625
        %v1000 = vmax.f32 %v968, -0.625
        %v1001 = vmax.f32 %v969, -0.625
        %v1002 = vmax.f32 %v970, -0.625
        %v1003 = vmax.f32 %v971, -0.625
        %v1004 = vmax.f32 %v972, -0.625
        %v1005 = vmax.f32 %v973, -0.625
        %v1006 = vmax.f32 %v974, -0.625
        %v1007 = vmax.f32 %v975, -0.625
        %v1008 = vmax.f32 %v976, -0.625
        %v1009 = vmax.f32 %v977, -0.625
        %v1010 = vmax.f32 %v978, -0.625
        %v1011 = vmax.f32 %v979, -0.625
        %v1012 = vmax.f32 %v980, -0.625
        %v1013 = vmax.f32 %v981, -0.625
        %v1014 = vmax.f32 %v982, -0.625
        %v1015 = vmin.f32 %v983, 0.625
        %v1016 = vmin.f32 %v984, 0.625
        %v1017 = vmin.f32 %v985, 0.625
        %v1018 = vmin.f32 %v986, 0.625
        %v1019 = vmin.f32 %v987, 0.625
        %v1020 = vmin.f32 %v988, 0.625
        %v1021 = vmin.f32 %v989, 0.625
        %v1022 = vmin.f32 %v990, 0.625
        %v1023 = vmin.f32 %v991, 0.625
        %v1024 = vmin.f32 %v992, 0.625
        %v1025 = vmin.f32 %v993, 0.625
        %v1026 = vmin.f32 %v994, 0.625
        %v1027 = vmin.f32 %v995, 0.625
        %v1028 = vmin.f32 %v996, 0.625
        %v1029 = vmin.f32 %v997, 0.625
        %v1030 = vmin.f32 %v998, 0.625
        %v1031 = vmin.f32 %v999, 0.625
        %v1032 = vmin.f32 %v1000, 0.625
        %v1033 = vmin.f32 %v1001, 0.625
        %v1034 = vmin.f32 %v1002, 0.625
        %v1035 = vmin.f32 %v1003, 0.625
        %v1036 = vmin.f32 %v1004, 0.625
        %v1037 = vmin.f32 %v1005, 0.625
        %v1038 = vmin.f32 %v1006, 0.625
        %v1039 = vmin.f32 %v1007, 0.625
        %v1040 = vmin.f32 %v1008, 0.625
        %v1041 = vmin.f32 %v1009, 0.625
        %v1042 = vmin.f32 %v1010, 0.625
        %v1043 = vmin.f32 %v1011, 0.625
        %v1044 = vmin.f32 %v1012, 0.625
        %v1045 = vmin.f32 %v1013, 0.625
        %v1046 = vmin.f32 %v1014, 0.625
        %v1047 = vpack.c.bf16 %v1017, %v1015
        %v1048 = vpack.c.bf16 %v1018, %v1016
        %v1049 = vpack.c.bf16 %v1021, %v1019
        %v1050 = vpack.c.bf16 %v1022, %v1020
        %v1051 = vpack.c.bf16 %v1025, %v1023
        %v1052 = vpack.c.bf16 %v1026, %v1024
        %v1053 = vpack.c.bf16 %v1029, %v1027
        %v1054 = vpack.c.bf16 %v1030, %v1028
        %v1055 = vpack.c.bf16 %v1033, %v1031
        %v1056 = vpack.c.bf16 %v1034, %v1032
        %v1057 = vpack.c.bf16 %v1037, %v1035
        %v1058 = vpack.c.bf16 %v1038, %v1036
        %v1059 = vpack.c.bf16 %v1041, %v1039
        %v1060 = vpack.c.bf16 %v1042, %v1040
        %v1061 = vpack.c.bf16 %v1045, %v1043
        %v1062 = vpack.c.bf16 %v1046, %v1044
        %v1063 = vld [vmem:[#allocation7] sm:$0xff]
        %v1064 = vld [vmem:[#allocation7 + $0x8] sm:$0xff]
        %v1065 = vld [vmem:[#allocation7 + $0x10] sm:$0xff]
        %v1066 = vld [vmem:[#allocation7 + $0x18] sm:$0xff]
        %v1067 = vld [vmem:[#allocation7 + $0x20] sm:$0xff]
        %v1068 = vld [vmem:[#allocation7 + $0x28] sm:$0xff]
        %v1069 = vld [vmem:[#allocation7 + $0x30] sm:$0xff]
        %v1070 = vld [vmem:[#allocation7 + $0x38] sm:$0xff]
        %v1071 = vld [vmem:[#allocation7 + $0x40] sm:$0xff]
        %v1072 = vld [vmem:[#allocation7 + $0x48] sm:$0xff]
        %v1073 = vld [vmem:[#allocation7 + $0x50] sm:$0xff]
        %v1074 = vld [vmem:[#allocation7 + $0x58] sm:$0xff]
        %v1075 = vld [vmem:[#allocation7 + $0x60] sm:$0xff]
        %v1076 = vld [vmem:[#allocation7 + $0x68] sm:$0xff]
        %v1077 = vld [vmem:[#allocation7 + $0x70] sm:$0xff]
        %v1078 = vld [vmem:[#allocation7 + $0x78] sm:$0xff]
        %v1079 = vld [vmem:[#allocation7 + $0x80] sm:$0xff]
        %v1080 = vld [vmem:[#allocation7 + $0x88] sm:$0xff]
        %v1081 = vld [vmem:[#allocation7 + $0x90] sm:$0xff]
        %v1082 = vld [vmem:[#allocation7 + $0x98] sm:$0xff]
        %v1083 = vld [vmem:[#allocation7 + $0xa0] sm:$0xff]
        %v1084 = vld [vmem:[#allocation7 + $0xa8] sm:$0xff]
        %v1085 = vld [vmem:[#allocation7 + $0xb0] sm:$0xff]
        %v1086 = vld [vmem:[#allocation7 + $0xb8] sm:$0xff]
        %v1087 = vld [vmem:[#allocation7 + $0xc0] sm:$0xff]
        %v1088 = vld [vmem:[#allocation7 + $0xc8] sm:$0xff]
        %v1089 = vld [vmem:[#allocation7 + $0xd0] sm:$0xff]
        %v1090 = vld [vmem:[#allocation7 + $0xd8] sm:$0xff]
        %v1091 = vld [vmem:[#allocation7 + $0xe0] sm:$0xff]
        %v1092 = vld [vmem:[#allocation7 + $0xe8] sm:$0xff]
        %v1093 = vld [vmem:[#allocation7 + $0xf0] sm:$0xff]
        %v1094 = vld [vmem:[#allocation7 + $0xf8] sm:$0xff]
        %v1095 = vld [vmem:[#allocation7 + $0x100] sm:$0xff]
        %v1096 = vld [vmem:[#allocation7 + $0x108] sm:$0xff]
        %v1097 = vld [vmem:[#allocation7 + $0x110] sm:$0xff]
        %v1098 = vld [vmem:[#allocation7 + $0x118] sm:$0xff]
        %v1099 = vld [vmem:[#allocation7 + $0x120] sm:$0xff]
        %v1100 = vld [vmem:[#allocation7 + $0x128] sm:$0xff]
        %v1101 = vld [vmem:[#allocation7 + $0x130] sm:$0xff]
        %v1102 = vld [vmem:[#allocation7 + $0x138] sm:$0xff]
        %v1103 = vld [vmem:[#allocation7 + $0x140] sm:$0xff]
        %v1104 = vld [vmem:[#allocation7 + $0x148] sm:$0xff]
        %v1105 = vld [vmem:[#allocation7 + $0x150] sm:$0xff]
        %v1106 = vld [vmem:[#allocation7 + $0x158] sm:$0xff]
        %v1107 = vld [vmem:[#allocation7 + $0x160] sm:$0xff]
        %v1108 = vld [vmem:[#allocation7 + $0x168] sm:$0xff]
        %v1109 = vld [vmem:[#allocation7 + $0x170] sm:$0xff]
        %v1110 = vld [vmem:[#allocation7 + $0x178] sm:$0xff]
        %v1111 = vld [vmem:[#allocation7 + $0x180] sm:$0xff]
        %v1112 = vld [vmem:[#allocation7 + $0x188] sm:$0xff]
        %v1113 = vld [vmem:[#allocation7 + $0x190] sm:$0xff]
        %v1114 = vld [vmem:[#allocation7 + $0x198] sm:$0xff]
        %v1115 = vld [vmem:[#allocation7 + $0x1a0] sm:$0xff]
        %v1116 = vld [vmem:[#allocation7 + $0x1a8] sm:$0xff]
        %v1117 = vld [vmem:[#allocation7 + $0x1b0] sm:$0xff]
        %v1118 = vld [vmem:[#allocation7 + $0x1b8] sm:$0xff]
        %v1119 = vld [vmem:[#allocation7 + $0x1c0] sm:$0xff]
        %v1120 = vld [vmem:[#allocation7 + $0x1c8] sm:$0xff]
        %v1121 = vld [vmem:[#allocation7 + $0x1d0] sm:$0xff]
        %v1122 = vld [vmem:[#allocation7 + $0x1d8] sm:$0xff]
        %v1123 = vld [vmem:[#allocation7 + $0x1e0] sm:$0xff]
        %v1124 = vld [vmem:[#allocation7 + $0x1e8] sm:$0xff]
        %v1125 = vld [vmem:[#allocation7 + $0x1f0] sm:$0xff]
        %v1126 = vld [vmem:[#allocation7 + $0x1f8] sm:$0xff]
        %v1127 = vld [vmem:[%s3] sm:$0xf]
        %v1129 = vperm.slane %v1127, 0
        %v1130 = vperm.slane %v1127, 1
        %v1131 = vperm.slane %v1127, 2
        %v1132 = vperm.slane %v1127, 3
        %v1201 = vunpack.c.l.b16 %v1063
        %v1202 = vunpack.c.h.b16 %v1063
        %v1203 = vunpack.c.l.b16 %v1064
        %v1204 = vunpack.c.h.b16 %v1064
        %v1205 = vunpack.c.l.b16 %v1065
        %v1206 = vunpack.c.h.b16 %v1065
        %v1207 = vunpack.c.l.b16 %v1066
        %v1208 = vunpack.c.h.b16 %v1066
        %v1209 = vunpack.c.l.b16 %v1067
        %v1210 = vunpack.c.h.b16 %v1067
        %v1211 = vunpack.c.l.b16 %v1068
        %v1212 = vunpack.c.h.b16 %v1068
        %v1213 = vunpack.c.l.b16 %v1069
        %v1214 = vunpack.c.h.b16 %v1069
        %v1215 = vunpack.c.l.b16 %v1070
        %v1216 = vunpack.c.h.b16 %v1070
        %v1217 = vunpack.c.l.b16 %v1071
        %v1218 = vunpack.c.h.b16 %v1071
        %v1219 = vunpack.c.l.b16 %v1072
        %v1220 = vunpack.c.h.b16 %v1072
        %v1221 = vunpack.c.l.b16 %v1073
        %v1222 = vunpack.c.h.b16 %v1073
        %v1223 = vunpack.c.l.b16 %v1074
        %v1224 = vunpack.c.h.b16 %v1074
        %v1225 = vunpack.c.l.b16 %v1075
        %v1226 = vunpack.c.h.b16 %v1075
        %v1227 = vunpack.c.l.b16 %v1076
        %v1228 = vunpack.c.h.b16 %v1076
        %v1229 = vunpack.c.l.b16 %v1077
        %v1230 = vunpack.c.h.b16 %v1077
        %v1231 = vunpack.c.l.b16 %v1078
        %v1232 = vunpack.c.h.b16 %v1078
        %v1233 = vunpack.c.l.b16 %v1079
        %v1234 = vunpack.c.h.b16 %v1079
        %v1235 = vunpack.c.l.b16 %v1080
        %v1236 = vunpack.c.h.b16 %v1080
        %v1237 = vunpack.c.l.b16 %v1081
        %v1238 = vunpack.c.h.b16 %v1081
        %v1239 = vunpack.c.l.b16 %v1082
        %v1240 = vunpack.c.h.b16 %v1082
        %v1241 = vunpack.c.l.b16 %v1083
        %v1242 = vunpack.c.h.b16 %v1083
        %v1243 = vunpack.c.l.b16 %v1084
        %v1244 = vunpack.c.h.b16 %v1084
        %v1245 = vunpack.c.l.b16 %v1085
        %v1246 = vunpack.c.h.b16 %v1085
        %v1247 = vunpack.c.l.b16 %v1086
        %v1248 = vunpack.c.h.b16 %v1086
        %v1249 = vunpack.c.l.b16 %v1087
        %v1250 = vunpack.c.h.b16 %v1087
        %v1251 = vunpack.c.l.b16 %v1088
        %v1252 = vunpack.c.h.b16 %v1088
        %v1253 = vunpack.c.l.b16 %v1089
        %v1254 = vunpack.c.h.b16 %v1089
        %v1255 = vunpack.c.l.b16 %v1090
        %v1256 = vunpack.c.h.b16 %v1090
        %v1257 = vunpack.c.l.b16 %v1091
        %v1258 = vunpack.c.h.b16 %v1091
        %v1259 = vunpack.c.l.b16 %v1092
        %v1260 = vunpack.c.h.b16 %v1092
        %v1261 = vunpack.c.l.b16 %v1093
        %v1262 = vunpack.c.h.b16 %v1093
        %v1263 = vunpack.c.l.b16 %v1094
        %v1264 = vunpack.c.h.b16 %v1094
        %v1265 = vunpack.c.l.b16 %v1095
        %v1266 = vunpack.c.h.b16 %v1095
        %v1267 = vunpack.c.l.b16 %v1096
        %v1268 = vunpack.c.h.b16 %v1096
        %v1269 = vunpack.c.l.b16 %v1097
        %v1270 = vunpack.c.h.b16 %v1097
        %v1271 = vunpack.c.l.b16 %v1098
        %v1272 = vunpack.c.h.b16 %v1098
        %v1273 = vunpack.c.l.b16 %v1099
        %v1274 = vunpack.c.h.b16 %v1099
        %v1275 = vunpack.c.l.b16 %v1100
        %v1276 = vunpack.c.h.b16 %v1100
        %v1277 = vunpack.c.l.b16 %v1101
        %v1278 = vunpack.c.h.b16 %v1101
        %v1279 = vunpack.c.l.b16 %v1102
        %v1280 = vunpack.c.h.b16 %v1102
        %v1281 = vunpack.c.l.b16 %v1103
        %v1282 = vunpack.c.h.b16 %v1103
        %v1283 = vunpack.c.l.b16 %v1104
        %v1284 = vunpack.c.h.b16 %v1104
        %v1285 = vunpack.c.l.b16 %v1105
        %v1286 = vunpack.c.h.b16 %v1105
        %v1287 = vunpack.c.l.b16 %v1106
        %v1288 = vunpack.c.h.b16 %v1106
        %v1289 = vunpack.c.l.b16 %v1107
        %v1290 = vunpack.c.h.b16 %v1107
        %v1291 = vunpack.c.l.b16 %v1108
        %v1292 = vunpack.c.h.b16 %v1108
        %v1293 = vunpack.c.l.b16 %v1109
        %v1294 = vunpack.c.h.b16 %v1109
        %v1295 = vunpack.c.l.b16 %v1110
        %v1296 = vunpack.c.h.b16 %v1110
        %v1297 = vunpack.c.l.b16 %v1111
        %v1298 = vunpack.c.h.b16 %v1111
        %v1299 = vunpack.c.l.b16 %v1112
        %v1300 = vunpack.c.h.b16 %v1112
        %v1301 = vunpack.c.l.b16 %v1113
        %v1302 = vunpack.c.h.b16 %v1113
        %v1303 = vunpack.c.l.b16 %v1114
        %v1304 = vunpack.c.h.b16 %v1114
        %v1305 = vunpack.c.l.b16 %v1115
        %v1306 = vunpack.c.h.b16 %v1115
        %v1307 = vunpack.c.l.b16 %v1116
        %v1308 = vunpack.c.h.b16 %v1116
        %v1309 = vunpack.c.l.b16 %v1117
        %v1310 = vunpack.c.h.b16 %v1117
        %v1311 = vunpack.c.l.b16 %v1118
        %v1312 = vunpack.c.h.b16 %v1118
        %v1313 = vunpack.c.l.b16 %v1119
        %v1314 = vunpack.c.h.b16 %v1119
        %v1315 = vunpack.c.l.b16 %v1120
        %v1316 = vunpack.c.h.b16 %v1120
        %v1317 = vunpack.c.l.b16 %v1121
        %v1318 = vunpack.c.h.b16 %v1121
        %v1319 = vunpack.c.l.b16 %v1122
        %v1320 = vunpack.c.h.b16 %v1122
        %v1321 = vunpack.c.l.b16 %v1123
        %v1322 = vunpack.c.h.b16 %v1123
        %v1323 = vunpack.c.l.b16 %v1124
        %v1324 = vunpack.c.h.b16 %v1124
        %v1325 = vunpack.c.l.b16 %v1125
        %v1326 = vunpack.c.h.b16 %v1125
        %v1327 = vunpack.c.l.b16 %v1126
        %v1328 = vunpack.c.h.b16 %v1126
        %v1329 = vpack.c.b16 %v1205, %v1201
        %v1330 = vpack.c.b16 %v1206, %v1202
        %v1331 = vpack.c.b16 %v1207, %v1203
        %v1332 = vpack.c.b16 %v1208, %v1204
        %v1333 = vpack.c.b16 %v1213, %v1209
        %v1334 = vpack.c.b16 %v1214, %v1210
        %v1335 = vpack.c.b16 %v1215, %v1211
        %v1336 = vpack.c.b16 %v1216, %v1212
        %v1337 = vpack.c.b16 %v1221, %v1217
        %v1338 = vpack.c.b16 %v1222, %v1218
        %v1339 = vpack.c.b16 %v1223, %v1219
        %v1340 = vpack.c.b16 %v1224, %v1220
        %v1341 = vpack.c.b16 %v1229, %v1225
        %v1342 = vpack.c.b16 %v1230, %v1226
        %v1343 = vpack.c.b16 %v1231, %v1227
        %v1344 = vpack.c.b16 %v1232, %v1228
        %v1345 = vpack.c.b16 %v1237, %v1233
        %v1346 = vpack.c.b16 %v1238, %v1234
        %v1347 = vpack.c.b16 %v1239, %v1235
        %v1348 = vpack.c.b16 %v1240, %v1236
        %v1349 = vpack.c.b16 %v1245, %v1241
        %v1350 = vpack.c.b16 %v1246, %v1242
        %v1351 = vpack.c.b16 %v1247, %v1243
        %v1352 = vpack.c.b16 %v1248, %v1244
        %v1353 = vpack.c.b16 %v1253, %v1249
        %v1354 = vpack.c.b16 %v1254, %v1250
        %v1355 = vpack.c.b16 %v1255, %v1251
        %v1356 = vpack.c.b16 %v1256, %v1252
        %v1357 = vpack.c.b16 %v1261, %v1257
        %v1358 = vpack.c.b16 %v1262, %v1258
        %v1359 = vpack.c.b16 %v1263, %v1259
        %v1360 = vpack.c.b16 %v1264, %v1260
        %v1361 = vpack.c.b16 %v1269, %v1265
        %v1362 = vpack.c.b16 %v1270, %v1266
        %v1363 = vpack.c.b16 %v1271, %v1267
        %v1364 = vpack.c.b16 %v1272, %v1268
        %v1365 = vpack.c.b16 %v1277, %v1273
        %v1366 = vpack.c.b16 %v1278, %v1274
        %v1367 = vpack.c.b16 %v1279, %v1275
        %v1368 = vpack.c.b16 %v1280, %v1276
        %v1369 = vpack.c.b16 %v1285, %v1281
        %v1370 = vpack.c.b16 %v1286, %v1282
        %v1371 = vpack.c.b16 %v1287, %v1283
        %v1372 = vpack.c.b16 %v1288, %v1284
        %v1373 = vpack.c.b16 %v1293, %v1289
        %v1374 = vpack.c.b16 %v1294, %v1290
        %v1375 = vpack.c.b16 %v1295, %v1291
        %v1376 = vpack.c.b16 %v1296, %v1292
        %v1377 = vpack.c.b16 %v1301, %v1297
        %v1378 = vpack.c.b16 %v1302, %v1298
        %v1379 = vpack.c.b16 %v1303, %v1299
        %v1380 = vpack.c.b16 %v1304, %v1300
        %v1381 = vpack.c.b16 %v1309, %v1305
        %v1382 = vpack.c.b16 %v1310, %v1306
        %v1383 = vpack.c.b16 %v1311, %v1307
        %v1384 = vpack.c.b16 %v1312, %v1308
        %v1385 = vpack.c.b16 %v1317, %v1313
        %v1386 = vpack.c.b16 %v1318, %v1314
        %v1387 = vpack.c.b16 %v1319, %v1315
        %v1388 = vpack.c.b16 %v1320, %v1316
        %v1389 = vpack.c.b16 %v1325, %v1321
        %v1390 = vpack.c.b16 %v1326, %v1322
        %v1391 = vpack.c.b16 %v1327, %v1323
        %v1392 = vpack.c.b16 %v1328, %v1324
        %1457 = vmatpush.bf16.msra.mxu0 %v1357
        %1458 = vmatpush.bf16.msra.mxu0 %v1353
        %1459 = vmatpush.bf16.msra.mxu0 %v1349
        %1460 = vmatpush.bf16.msra.mxu0 %v1345
        %1461 = vmatpush.bf16.msra.mxu0 %v1341
        %1462 = vmatpush.bf16.msra.mxu0 %v1337
        %1463 = vmatpush.bf16.msra.mxu0 %v1333
        %1464 = vmatpush.bf16.msra.mxu0 %v1329
        %1465 = vmatmul.bf16.gmra.mxu0 %v1047
        %v1466 = vpop.f32.mrf.mxu0
        %v1467 = vadd.f32 %v1129, %v1466
        %v1468 = vpop.f32.mrf.mxu0
        %v1469 = vadd.f32 %v1129, %v1468
        %1470 = vmatmul.bf16.gmra.mxu0 %v1049
        %v1471 = vpop.f32.mrf.mxu0
        %v1472 = vadd.f32 %v1129, %v1471
        %v1473 = vpop.f32.mrf.mxu0
        %v1474 = vadd.f32 %v1129, %v1473
        %1475 = vmatmul.bf16.gmra.mxu0 %v1051
        %v1476 = vpop.f32.mrf.mxu0
        %v1477 = vadd.f32 %v1129, %v1476
        %v1478 = vpop.f32.mrf.mxu0
        %v1479 = vadd.f32 %v1129, %v1478
        %1480 = vmatmul.bf16.gmra.mxu0 %v1053
        %v1481 = vpop.f32.mrf.mxu0
        %v1482 = vadd.f32 %v1129, %v1481
        %v1483 = vpop.f32.mrf.mxu0
        %v1484 = vadd.f32 %v1129, %v1483
        %1485 = vmatmul.bf16.gmra.mxu0 %v1055
        %v1486 = vpop.f32.mrf.mxu0
        %v1487 = vadd.f32 %v1129, %v1486
        %v1488 = vpop.f32.mrf.mxu0
        %v1489 = vadd.f32 %v1129, %v1488
        %1490 = vmatmul.bf16.gmra.mxu0 %v1057
        %v1491 = vpop.f32.mrf.mxu0
        %v1492 = vadd.f32 %v1129, %v1491
        %v1493 = vpop.f32.mrf.mxu0
        %v1494 = vadd.f32 %v1129, %v1493
        %1495 = vmatmul.bf16.gmra.mxu0 %v1059
        %v1496 = vpop.f32.mrf.mxu0
        %v1497 = vadd.f32 %v1129, %v1496
        %v1498 = vpop.f32.mrf.mxu0
        %v1499 = vadd.f32 %v1129, %v1498
        %1500 = vmatmul.bf16.gmra.mxu0 %v1061
        %v1501 = vpop.f32.mrf.mxu0
        %v1502 = vadd.f32 %v1129, %v1501
        %v1503 = vpop.f32.mrf.mxu0
        %v1504 = vadd.f32 %v1129, %v1503
        %1505 = vdwg.mxu0
        %1506 = vmatpush.bf16.msra.mxu0 %v1389
        %1507 = vmatpush.bf16.msra.mxu0 %v1385
        %1508 = vmatpush.bf16.msra.mxu0 %v1381
        %1509 = vmatpush.bf16.msra.mxu0 %v1377
        %1510 = vmatpush.bf16.msra.mxu0 %v1373
        %1511 = vmatpush.bf16.msra.mxu0 %v1369
        %1512 = vmatpush.bf16.msra.mxu0 %v1365
        %1513 = vmatpush.bf16.msra.mxu0 %v1361
        %1514 = vmatmul.bf16.gmra.mxu0 %v1048
        %v1515 = vpop.f32.mrf.mxu0
        %v1516 = vadd.f32 %v1467, %v1515
        %v1517 = vpop.f32.mrf.mxu0
        %v1518 = vadd.f32 %v1469, %v1517
        %1519 = vmatmul.bf16.gmra.mxu0 %v1050
        %v1520 = vpop.f32.mrf.mxu0
        %v1521 = vadd.f32 %v1472, %v1520
        %v1522 = vpop.f32.mrf.mxu0
        %v1523 = vadd.f32 %v1474, %v1522
        %1524 = vmatmul.bf16.gmra.mxu0 %v1052
        %v1525 = vpop.f32.mrf.mxu0
        %v1526 = vadd.f32 %v1477, %v1525
        %v1527 = vpop.f32.mrf.mxu0
        %v1528 = vadd.f32 %v1479, %v1527
        %1529 = vmatmul.bf16.gmra.mxu0 %v1054
        %v1530 = vpop.f32.mrf.mxu0
        %v1531 = vadd.f32 %v1482, %v1530
        %v1532 = vpop.f32.mrf.mxu0
        %v1533 = vadd.f32 %v1484, %v1532
        %1534 = vmatmul.bf16.gmra.mxu0 %v1056
        %v1535 = vpop.f32.mrf.mxu0
        %v1536 = vadd.f32 %v1487, %v1535
        %v1537 = vpop.f32.mrf.mxu0
        %v1538 = vadd.f32 %v1489, %v1537
        %1539 = vmatmul.bf16.gmra.mxu0 %v1058
        %v1540 = vpop.f32.mrf.mxu0
        %v1541 = vadd.f32 %v1492, %v1540
        %v1542 = vpop.f32.mrf.mxu0
        %v1543 = vadd.f32 %v1494, %v1542
        %1544 = vmatmul.bf16.gmra.mxu0 %v1060
        %v1545 = vpop.f32.mrf.mxu0
        %v1546 = vadd.f32 %v1497, %v1545
        %v1547 = vpop.f32.mrf.mxu0
        %v1548 = vadd.f32 %v1499, %v1547
        %1549 = vmatmul.bf16.gmra.mxu0 %v1062
        %v1550 = vpop.f32.mrf.mxu0
        %v1551 = vadd.f32 %v1502, %v1550
        %v1552 = vpop.f32.mrf.mxu0
        %v1553 = vadd.f32 %v1504, %v1552
        %1554 = vdwg.mxu0
        %1555 = vmatpush.bf16.msra.mxu0 %v1358
        %1556 = vmatpush.bf16.msra.mxu0 %v1354
        %1557 = vmatpush.bf16.msra.mxu0 %v1350
        %1558 = vmatpush.bf16.msra.mxu0 %v1346
        %1559 = vmatpush.bf16.msra.mxu0 %v1342
        %1560 = vmatpush.bf16.msra.mxu0 %v1338
        %1561 = vmatpush.bf16.msra.mxu0 %v1334
        %1562 = vmatpush.bf16.msra.mxu0 %v1330
        %1563 = vmatmul.bf16.gmra.mxu0 %v1047
        %v1564 = vpop.f32.mrf.mxu0
        %v1565 = vadd.f32 %v1130, %v1564
        %v1566 = vpop.f32.mrf.mxu0
        %v1567 = vadd.f32 %v1130, %v1566
        %1568 = vmatmul.bf16.gmra.mxu0 %v1049
        %v1569 = vpop.f32.mrf.mxu0
        %v1570 = vadd.f32 %v1130, %v1569
        %v1571 = vpop.f32.mrf.mxu0
        %v1572 = vadd.f32 %v1130, %v1571
        %1573 = vmatmul.bf16.gmra.mxu0 %v1051
        %v1574 = vpop.f32.mrf.mxu0
        %v1575 = vadd.f32 %v1130, %v1574
        %v1576 = vpop.f32.mrf.mxu0
        %v1577 = vadd.f32 %v1130, %v1576
        %1578 = vmatmul.bf16.gmra.mxu0 %v1053
        %v1579 = vpop.f32.mrf.mxu0
        %v1580 = vadd.f32 %v1130, %v1579
        %v1581 = vpop.f32.mrf.mxu0
        %v1582 = vadd.f32 %v1130, %v1581
        %1583 = vmatmul.bf16.gmra.mxu0 %v1055
        %v1584 = vpop.f32.mrf.mxu0
        %v1585 = vadd.f32 %v1130, %v1584
        %v1586 = vpop.f32.mrf.mxu0
        %v1587 = vadd.f32 %v1130, %v1586
        %1588 = vmatmul.bf16.gmra.mxu0 %v1057
        %v1589 = vpop.f32.mrf.mxu0
        %v1590 = vadd.f32 %v1130, %v1589
        %v1591 = vpop.f32.mrf.mxu0
        %v1592 = vadd.f32 %v1130, %v1591
        %1593 = vmatmul.bf16.gmra.mxu0 %v1059
        %v1594 = vpop.f32.mrf.mxu0
        %v1595 = vadd.f32 %v1130, %v1594
        %v1596 = vpop.f32.mrf.mxu0
        %v1597 = vadd.f32 %v1130, %v1596
        %1598 = vmatmul.bf16.gmra.mxu0 %v1061
        %v1599 = vpop.f32.mrf.mxu0
        %v1600 = vadd.f32 %v1130, %v1599
        %v1601 = vpop.f32.mrf.mxu0
        %v1602 = vadd.f32 %v1130, %v1601
        %1603 = vdwg.mxu0
        %1604 = vmatpush.bf16.msra.mxu0 %v1390
        %1605 = vmatpush.bf16.msra.mxu0 %v1386
        %1606 = vmatpush.bf16.msra.mxu0 %v1382
        %1607 = vmatpush.bf16.msra.mxu0 %v1378
        %1608 = vmatpush.bf16.msra.mxu0 %v1374
        %1609 = vmatpush.bf16.msra.mxu0 %v1370
        %1610 = vmatpush.bf16.msra.mxu0 %v1366
        %1611 = vmatpush.bf16.msra.mxu0 %v1362
        %1612 = vmatmul.bf16.gmra.mxu0 %v1048
        %v1613 = vpop.f32.mrf.mxu0
        %v1614 = vadd.f32 %v1565, %v1613
        %v1615 = vpop.f32.mrf.mxu0
        %v1616 = vadd.f32 %v1567, %v1615
        %1617 = vmatmul.bf16.gmra.mxu0 %v1050
        %v1618 = vpop.f32.mrf.mxu0
        %v1619 = vadd.f32 %v1570, %v1618
        %v1620 = vpop.f32.mrf.mxu0
        %v1621 = vadd.f32 %v1572, %v1620
        %1622 = vmatmul.bf16.gmra.mxu0 %v1052
        %v1623 = vpop.f32.mrf.mxu0
        %v1624 = vadd.f32 %v1575, %v1623
        %v1625 = vpop.f32.mrf.mxu0
        %v1626 = vadd.f32 %v1577, %v1625
        %1627 = vmatmul.bf16.gmra.mxu0 %v1054
        %v1628 = vpop.f32.mrf.mxu0
        %v1629 = vadd.f32 %v1580, %v1628
        %v1630 = vpop.f32.mrf.mxu0
        %v1631 = vadd.f32 %v1582, %v1630
        %1632 = vmatmul.bf16.gmra.mxu0 %v1056
        %v1633 = vpop.f32.mrf.mxu0
        %v1634 = vadd.f32 %v1585, %v1633
        %v1635 = vpop.f32.mrf.mxu0
        %v1636 = vadd.f32 %v1587, %v1635
        %1637 = vmatmul.bf16.gmra.mxu0 %v1058
        %v1638 = vpop.f32.mrf.mxu0
        %v1639 = vadd.f32 %v1590, %v1638
        %v1640 = vpop.f32.mrf.mxu0
        %v1641 = vadd.f32 %v1592, %v1640
        %1642 = vmatmul.bf16.gmra.mxu0 %v1060
        %v1643 = vpop.f32.mrf.mxu0
        %v1644 = vadd.f32 %v1595, %v1643
        %v1645 = vpop.f32.mrf.mxu0
        %v1646 = vadd.f32 %v1597, %v1645
        %1647 = vmatmul.bf16.gmra.mxu0 %v1062
        %v1648 = vpop.f32.mrf.mxu0
        %v1649 = vadd.f32 %v1600, %v1648
        %v1650 = vpop.f32.mrf.mxu0
        %v1651 = vadd.f32 %v1602, %v1650
        %1652 = vdwg.mxu0
        %1653 = vmatpush.bf16.msra.mxu0 %v1359
        %1654 = vmatpush.bf16.msra.mxu0 %v1355
        %1655 = vmatpush.bf16.msra.mxu0 %v1351
        %1656 = vmatpush.bf16.msra.mxu0 %v1347
        %1657 = vmatpush.bf16.msra.mxu0 %v1343
        %1658 = vmatpush.bf16.msra.mxu0 %v1339
        %1659 = vmatpush.bf16.msra.mxu0 %v1335
        %1660 = vmatpush.bf16.msra.mxu0 %v1331
        %1661 = vmatmul.bf16.gmra.mxu0 %v1047
        %v1662 = vpop.f32.mrf.mxu0
        %v1663 = vadd.f32 %v1131, %v1662
        %v1664 = vpop.f32.mrf.mxu0
        %v1665 = vadd.f32 %v1131, %v1664
        %1666 = vmatmul.bf16.gmra.mxu0 %v1049
        %v1667 = vpop.f32.mrf.mxu0
        %v1668 = vadd.f32 %v1131, %v1667
        %v1669 = vpop.f32.mrf.mxu0
        %v1670 = vadd.f32 %v1131, %v1669
        %1671 = vmatmul.bf16.gmra.mxu0 %v1051
        %v1672 = vpop.f32.mrf.mxu0
        %v1673 = vadd.f32 %v1131, %v1672
        %v1674 = vpop.f32.mrf.mxu0
        %v1675 = vadd.f32 %v1131, %v1674
        %1676 = vmatmul.bf16.gmra.mxu0 %v1053
        %v1677 = vpop.f32.mrf.mxu0
        %v1678 = vadd.f32 %v1131, %v1677
        %v1679 = vpop.f32.mrf.mxu0
        %v1680 = vadd.f32 %v1131, %v1679
        %1681 = vmatmul.bf16.gmra.mxu0 %v1055
        %v1682 = vpop.f32.mrf.mxu0
        %v1683 = vadd.f32 %v1131, %v1682
        %v1684 = vpop.f32.mrf.mxu0
        %v1685 = vadd.f32 %v1131, %v1684
        %1686 = vmatmul.bf16.gmra.mxu0 %v1057
        %v1687 = vpop.f32.mrf.mxu0
        %v1688 = vadd.f32 %v1131, %v1687
        %v1689 = vpop.f32.mrf.mxu0
        %v1690 = vadd.f32 %v1131, %v1689
        %1691 = vmatmul.bf16.gmra.mxu0 %v1059
        %v1692 = vpop.f32.mrf.mxu0
        %v1693 = vadd.f32 %v1131, %v1692
        %v1694 = vpop.f32.mrf.mxu0
        %v1695 = vadd.f32 %v1131, %v1694
        %1696 = vmatmul.bf16.gmra.mxu0 %v1061
        %v1697 = vpop.f32.mrf.mxu0
        %v1698 = vadd.f32 %v1131, %v1697
        %v1699 = vpop.f32.mrf.mxu0
        %v1700 = vadd.f32 %v1131, %v1699
        %1701 = vdwg.mxu0
        %1702 = vmatpush.bf16.msra.mxu0 %v1391
        %1703 = vmatpush.bf16.msra.mxu0 %v1387
        %1704 = vmatpush.bf16.msra.mxu0 %v1383
        %1705 = vmatpush.bf16.msra.mxu0 %v1379
        %1706 = vmatpush.bf16.msra.mxu0 %v1375
        %1707 = vmatpush.bf16.msra.mxu0 %v1371
        %1708 = vmatpush.bf16.msra.mxu0 %v1367
        %1709 = vmatpush.bf16.msra.mxu0 %v1363
        %1710 = vmatmul.bf16.gmra.mxu0 %v1048
        %v1711 = vpop.f32.mrf.mxu0
        %v1712 = vadd.f32 %v1663, %v1711
        %v1713 = vpop.f32.mrf.mxu0
        %v1714 = vadd.f32 %v1665, %v1713
        %1715 = vmatmul.bf16.gmra.mxu0 %v1050
        %v1716 = vpop.f32.mrf.mxu0
        %v1717 = vadd.f32 %v1668, %v1716
        %v1718 = vpop.f32.mrf.mxu0
        %v1719 = vadd.f32 %v1670, %v1718
        %1720 = vmatmul.bf16.gmra.mxu0 %v1052
        %v1721 = vpop.f32.mrf.mxu0
        %v1722 = vadd.f32 %v1673, %v1721
        %v1723 = vpop.f32.mrf.mxu0
        %v1724 = vadd.f32 %v1675, %v1723
        %1725 = vmatmul.bf16.gmra.mxu0 %v1054
        %v1726 = vpop.f32.mrf.mxu0
        %v1727 = vadd.f32 %v1678, %v1726
        %v1728 = vpop.f32.mrf.mxu0
        %v1729 = vadd.f32 %v1680, %v1728
        %1730 = vmatmul.bf16.gmra.mxu0 %v1056
        %v1731 = vpop.f32.mrf.mxu0
        %v1732 = vadd.f32 %v1683, %v1731
        %v1733 = vpop.f32.mrf.mxu0
        %v1734 = vadd.f32 %v1685, %v1733
        %1735 = vmatmul.bf16.gmra.mxu0 %v1058
        %v1736 = vpop.f32.mrf.mxu0
        %v1737 = vadd.f32 %v1688, %v1736
        %v1738 = vpop.f32.mrf.mxu0
        %v1739 = vadd.f32 %v1690, %v1738
        %1740 = vmatmul.bf16.gmra.mxu0 %v1060
        %v1741 = vpop.f32.mrf.mxu0
        %v1742 = vadd.f32 %v1693, %v1741
        %v1743 = vpop.f32.mrf.mxu0
        %v1744 = vadd.f32 %v1695, %v1743
        %1745 = vmatmul.bf16.gmra.mxu0 %v1062
        %v1746 = vpop.f32.mrf.mxu0
        %v1747 = vadd.f32 %v1698, %v1746
        %v1748 = vpop.f32.mrf.mxu0
        %v1749 = vadd.f32 %v1700, %v1748
        %1750 = vdwg.mxu0
        %1751 = vmatpush.bf16.msra.mxu0 %v1360
        %1752 = vmatpush.bf16.msra.mxu0 %v1356
        %1753 = vmatpush.bf16.msra.mxu0 %v1352
        %1754 = vmatpush.bf16.msra.mxu0 %v1348
        %1755 = vmatpush.bf16.msra.mxu0 %v1344
        %1756 = vmatpush.bf16.msra.mxu0 %v1340
        %1757 = vmatpush.bf16.msra.mxu0 %v1336
        %1758 = vmatpush.bf16.msra.mxu0 %v1332
        %1759 = vmatmul.bf16.gmra.mxu0 %v1047
        %v1760 = vpop.f32.mrf.mxu0
        %v1761 = vadd.f32 %v1132, %v1760
        %v1762 = vpop.f32.mrf.mxu0
        %v1763 = vadd.f32 %v1132, %v1762
        %1764 = vmatmul.bf16.gmra.mxu0 %v1049
        %v1765 = vpop.f32.mrf.mxu0
        %v1766 = vadd.f32 %v1132, %v1765
        %v1767 = vpop.f32.mrf.mxu0
        %v1768 = vadd.f32 %v1132, %v1767
        %1769 = vmatmul.bf16.gmra.mxu0 %v1051
        %v1770 = vpop.f32.mrf.mxu0
        %v1771 = vadd.f32 %v1132, %v1770
        %v1772 = vpop.f32.mrf.mxu0
        %v1773 = vadd.f32 %v1132, %v1772
        %1774 = vmatmul.bf16.gmra.mxu0 %v1053
        %v1775 = vpop.f32.mrf.mxu0
        %v1776 = vadd.f32 %v1132, %v1775
        %v1777 = vpop.f32.mrf.mxu0
        %v1778 = vadd.f32 %v1132, %v1777
        %1779 = vmatmul.bf16.gmra.mxu0 %v1055
        %v1780 = vpop.f32.mrf.mxu0
        %v1781 = vadd.f32 %v1132, %v1780
        %v1782 = vpop.f32.mrf.mxu0
        %v1783 = vadd.f32 %v1132, %v1782
        %1784 = vmatmul.bf16.gmra.mxu0 %v1057
        %v1785 = vpop.f32.mrf.mxu0
        %v1786 = vadd.f32 %v1132, %v1785
        %v1787 = vpop.f32.mrf.mxu0
        %v1788 = vadd.f32 %v1132, %v1787
        %1789 = vmatmul.bf16.gmra.mxu0 %v1059
        %v1790 = vpop.f32.mrf.mxu0
        %v1791 = vadd.f32 %v1132, %v1790
        %v1792 = vpop.f32.mrf.mxu0
        %v1793 = vadd.f32 %v1132, %v1792
        %1794 = vmatmul.bf16.gmra.mxu0 %v1061
        %v1795 = vpop.f32.mrf.mxu0
        %v1796 = vadd.f32 %v1132, %v1795
        %v1797 = vpop.f32.mrf.mxu0
        %v1798 = vadd.f32 %v1132, %v1797
        %1799 = vdwg.mxu0
        %1800 = vmatpush.bf16.msra.mxu0 %v1392
        %1801 = vmatpush.bf16.msra.mxu0 %v1388
        %1802 = vmatpush.bf16.msra.mxu0 %v1384
        %1803 = vmatpush.bf16.msra.mxu0 %v1380
        %1804 = vmatpush.bf16.msra.mxu0 %v1376
        %1805 = vmatpush.bf16.msra.mxu0 %v1372
        %1806 = vmatpush.bf16.msra.mxu0 %v1368
        %1807 = vmatpush.bf16.msra.mxu0 %v1364
        %1808 = vmatmul.bf16.gmra.mxu0 %v1048
        %v1809 = vpop.f32.mrf.mxu0
        %v1810 = vadd.f32 %v1761, %v1809
        %v1811 = vpop.f32.mrf.mxu0
        %v1812 = vadd.f32 %v1763, %v1811
        %1813 = vmatmul.bf16.gmra.mxu0 %v1050
        %v1814 = vpop.f32.mrf.mxu0
        %v1815 = vadd.f32 %v1766, %v1814
        %v1816 = vpop.f32.mrf.mxu0
        %v1817 = vadd.f32 %v1768, %v1816
        %1818 = vmatmul.bf16.gmra.mxu0 %v1052
        %v1819 = vpop.f32.mrf.mxu0
        %v1820 = vadd.f32 %v1771, %v1819
        %v1821 = vpop.f32.mrf.mxu0
        %v1822 = vadd.f32 %v1773, %v1821
        %1823 = vmatmul.bf16.gmra.mxu0 %v1054
        %v1824 = vpop.f32.mrf.mxu0
        %v1825 = vadd.f32 %v1776, %v1824
        %v1826 = vpop.f32.mrf.mxu0
        %v1827 = vadd.f32 %v1778, %v1826
        %1828 = vmatmul.bf16.gmra.mxu0 %v1056
        %v1829 = vpop.f32.mrf.mxu0
        %v1830 = vadd.f32 %v1781, %v1829
        %v1831 = vpop.f32.mrf.mxu0
        %v1832 = vadd.f32 %v1783, %v1831
        %1833 = vmatmul.bf16.gmra.mxu0 %v1058
        %v1834 = vpop.f32.mrf.mxu0
        %v1835 = vadd.f32 %v1786, %v1834
        %v1836 = vpop.f32.mrf.mxu0
        %v1837 = vadd.f32 %v1788, %v1836
        %1838 = vmatmul.bf16.gmra.mxu0 %v1060
        %v1839 = vpop.f32.mrf.mxu0
        %v1840 = vadd.f32 %v1791, %v1839
        %v1841 = vpop.f32.mrf.mxu0
        %v1842 = vadd.f32 %v1793, %v1841
        %1843 = vmatmul.bf16.gmra.mxu0 %v1062
        %v1844 = vpop.f32.mrf.mxu0
        %v1845 = vadd.f32 %v1796, %v1844
        %v1846 = vpop.f32.mrf.mxu0
        %v1847 = vadd.f32 %v1798, %v1846
        %1848 = vdwg.mxu0
        %v1849 = vmax.f32 %v1516, -60.0
        %v1850 = vmax.f32 %v1614, -60.0
        %v1851 = vmax.f32 %v1712, -60.0
        %v1852 = vmax.f32 %v1810, -60.0
        %v1853 = vmax.f32 %v1518, -60.0
        %v1854 = vmax.f32 %v1616, -60.0
        %v1855 = vmax.f32 %v1714, -60.0
        %v1856 = vmax.f32 %v1812, -60.0
        %v1857 = vmax.f32 %v1521, -60.0
        %v1858 = vmax.f32 %v1619, -60.0
        %v1859 = vmax.f32 %v1717, -60.0
        %v1860 = vmax.f32 %v1815, -60.0
        %v1861 = vmax.f32 %v1523, -60.0
        %v1862 = vmax.f32 %v1621, -60.0
        %v1863 = vmax.f32 %v1719, -60.0
        %v1864 = vmax.f32 %v1817, -60.0
        %v1865 = vmax.f32 %v1526, -60.0
        %v1866 = vmax.f32 %v1624, -60.0
        %v1867 = vmax.f32 %v1722, -60.0
        %v1868 = vmax.f32 %v1820, -60.0
        %v1869 = vmax.f32 %v1528, -60.0
        %v1870 = vmax.f32 %v1626, -60.0
        %v1871 = vmax.f32 %v1724, -60.0
        %v1872 = vmax.f32 %v1822, -60.0
        %v1873 = vmax.f32 %v1531, -60.0
        %v1874 = vmax.f32 %v1629, -60.0
        %v1875 = vmax.f32 %v1727, -60.0
        %v1876 = vmax.f32 %v1825, -60.0
        %v1877 = vmax.f32 %v1533, -60.0
        %v1878 = vmax.f32 %v1631, -60.0
        %v1879 = vmax.f32 %v1729, -60.0
        %v1880 = vmax.f32 %v1827, -60.0
        %v1881 = vmax.f32 %v1536, -60.0
        %v1882 = vmax.f32 %v1634, -60.0
        %v1883 = vmax.f32 %v1732, -60.0
        %v1884 = vmax.f32 %v1830, -60.0
        %v1885 = vmax.f32 %v1538, -60.0
        %v1886 = vmax.f32 %v1636, -60.0
        %v1887 = vmax.f32 %v1734, -60.0
        %v1888 = vmax.f32 %v1832, -60.0
        %v1889 = vmax.f32 %v1541, -60.0
        %v1890 = vmax.f32 %v1639, -60.0
        %v1891 = vmax.f32 %v1737, -60.0
        %v1892 = vmax.f32 %v1835, -60.0
        %v1893 = vmax.f32 %v1543, -60.0
        %v1894 = vmax.f32 %v1641, -60.0
        %v1895 = vmax.f32 %v1739, -60.0
        %v1896 = vmax.f32 %v1837, -60.0
        %v1897 = vmax.f32 %v1546, -60.0
        %v1898 = vmax.f32 %v1644, -60.0
        %v1899 = vmax.f32 %v1742, -60.0
        %v1900 = vmax.f32 %v1840, -60.0
        %v1901 = vmax.f32 %v1548, -60.0
        %v1902 = vmax.f32 %v1646, -60.0
        %v1903 = vmax.f32 %v1744, -60.0
        %v1904 = vmax.f32 %v1842, -60.0
        %v1905 = vmax.f32 %v1551, -60.0
        %v1906 = vmax.f32 %v1649, -60.0
        %v1907 = vmax.f32 %v1747, -60.0
        %v1908 = vmax.f32 %v1845, -60.0
        %v1909 = vmax.f32 %v1553, -60.0
        %v1910 = vmax.f32 %v1651, -60.0
        %v1911 = vmax.f32 %v1749, -60.0
        %v1912 = vmax.f32 %v1847, -60.0
        %v1913 = vmin.f32 %v1849, 60.0
        %v1914 = vmin.f32 %v1850, 60.0
        %v1915 = vmin.f32 %v1851, 60.0
        %v1916 = vmin.f32 %v1852, 60.0
        %v1917 = vmin.f32 %v1853, 60.0
        %v1918 = vmin.f32 %v1854, 60.0
        %v1919 = vmin.f32 %v1855, 60.0
        %v1920 = vmin.f32 %v1856, 60.0
        %v1921 = vmin.f32 %v1857, 60.0
        %v1922 = vmin.f32 %v1858, 60.0
        %v1923 = vmin.f32 %v1859, 60.0
        %v1924 = vmin.f32 %v1860, 60.0
        %v1925 = vmin.f32 %v1861, 60.0
        %v1926 = vmin.f32 %v1862, 60.0
        %v1927 = vmin.f32 %v1863, 60.0
        %v1928 = vmin.f32 %v1864, 60.0
        %v1929 = vmin.f32 %v1865, 60.0
        %v1930 = vmin.f32 %v1866, 60.0
        %v1931 = vmin.f32 %v1867, 60.0
        %v1932 = vmin.f32 %v1868, 60.0
        %v1933 = vmin.f32 %v1869, 60.0
        %v1934 = vmin.f32 %v1870, 60.0
        %v1935 = vmin.f32 %v1871, 60.0
        %v1936 = vmin.f32 %v1872, 60.0
        %v1937 = vmin.f32 %v1873, 60.0
        %v1938 = vmin.f32 %v1874, 60.0
        %v1939 = vmin.f32 %v1875, 60.0
        %v1940 = vmin.f32 %v1876, 60.0
        %v1941 = vmin.f32 %v1877, 60.0
        %v1942 = vmin.f32 %v1878, 60.0
        %v1943 = vmin.f32 %v1879, 60.0
        %v1944 = vmin.f32 %v1880, 60.0
        %v1945 = vmin.f32 %v1881, 60.0
        %v1946 = vmin.f32 %v1882, 60.0
        %v1947 = vmin.f32 %v1883, 60.0
        %v1948 = vmin.f32 %v1884, 60.0
        %v1949 = vmin.f32 %v1885, 60.0
        %v1950 = vmin.f32 %v1886, 60.0
        %v1951 = vmin.f32 %v1887, 60.0
        %v1952 = vmin.f32 %v1888, 60.0
        %v1953 = vmin.f32 %v1889, 60.0
        %v1954 = vmin.f32 %v1890, 60.0
        %v1955 = vmin.f32 %v1891, 60.0
        %v1956 = vmin.f32 %v1892, 60.0
        %v1957 = vmin.f32 %v1893, 60.0
        %v1958 = vmin.f32 %v1894, 60.0
        %v1959 = vmin.f32 %v1895, 60.0
        %v1960 = vmin.f32 %v1896, 60.0
        %v1961 = vmin.f32 %v1897, 60.0
        %v1962 = vmin.f32 %v1898, 60.0
        %v1963 = vmin.f32 %v1899, 60.0
        %v1964 = vmin.f32 %v1900, 60.0
        %v1965 = vmin.f32 %v1901, 60.0
        %v1966 = vmin.f32 %v1902, 60.0
        %v1967 = vmin.f32 %v1903, 60.0
        %v1968 = vmin.f32 %v1904, 60.0
        %v1969 = vmin.f32 %v1905, 60.0
        %v1970 = vmin.f32 %v1906, 60.0
        %v1971 = vmin.f32 %v1907, 60.0
        %v1972 = vmin.f32 %v1908, 60.0
        %v1973 = vmin.f32 %v1909, 60.0
        %v1974 = vmin.f32 %v1910, 60.0
        %v1975 = vmin.f32 %v1911, 60.0
        %v1976 = vmin.f32 %v1912, 60.0
        %v1977 = vadd.f32 %v1913, %v1914
        %v1978 = vadd.f32 %v1977, %v1915
        %v1979 = vadd.f32 %v1978, %v1916
        %1980 = vadd.xlane.f32.xlu0 %v1979
        %v1981 = vpop.xlane.xlu0 %1980
        %v1982 = vadd.f32 %v1917, %v1918
        %v1983 = vadd.f32 %v1982, %v1919
        %v1984 = vadd.f32 %v1983, %v1920
        %1985 = vadd.xlane.f32.xlu0 %v1984
        %v1986 = vpop.xlane.xlu0 %1985
        %v1987 = vadd.f32 %v1921, %v1922
        %v1988 = vadd.f32 %v1987, %v1923
        %v1989 = vadd.f32 %v1988, %v1924
        %1990 = vadd.xlane.f32.xlu0 %v1989
        %v1991 = vpop.xlane.xlu0 %1990
        %v1992 = vadd.f32 %v1925, %v1926
        %v1993 = vadd.f32 %v1992, %v1927
        %v1994 = vadd.f32 %v1993, %v1928
        %1995 = vadd.xlane.f32.xlu0 %v1994
        %v1996 = vpop.xlane.xlu0 %1995
        %v1997 = vadd.f32 %v1929, %v1930
        %v1998 = vadd.f32 %v1997, %v1931
        %v1999 = vadd.f32 %v1998, %v1932
        %2000 = vadd.xlane.f32.xlu0 %v1999
        %v2001 = vpop.xlane.xlu0 %2000
        %v2002 = vadd.f32 %v1933, %v1934
        %v2003 = vadd.f32 %v2002, %v1935
        %v2004 = vadd.f32 %v2003, %v1936
        %2005 = vadd.xlane.f32.xlu0 %v2004
        %v2006 = vpop.xlane.xlu0 %2005
        %v2007 = vadd.f32 %v1937, %v1938
        %v2008 = vadd.f32 %v2007, %v1939
        %v2009 = vadd.f32 %v2008, %v1940
        %2010 = vadd.xlane.f32.xlu0 %v2009
        %v2011 = vpop.xlane.xlu0 %2010
        %v2012 = vadd.f32 %v1941, %v1942
        %v2013 = vadd.f32 %v2012, %v1943
        %v2014 = vadd.f32 %v2013, %v1944
        %2015 = vadd.xlane.f32.xlu0 %v2014
        %v2016 = vpop.xlane.xlu0 %2015
        %v2017 = vadd.f32 %v1945, %v1946
        %v2018 = vadd.f32 %v2017, %v1947
        %v2019 = vadd.f32 %v2018, %v1948
        %2020 = vadd.xlane.f32.xlu0 %v2019
        %v2021 = vpop.xlane.xlu0 %2020
        %v2022 = vadd.f32 %v1949, %v1950
        %v2023 = vadd.f32 %v2022, %v1951
        %v2024 = vadd.f32 %v2023, %v1952
        %2025 = vadd.xlane.f32.xlu0 %v2024
        %v2026 = vpop.xlane.xlu0 %2025
        %v2027 = vadd.f32 %v1953, %v1954
        %v2028 = vadd.f32 %v2027, %v1955
        %v2029 = vadd.f32 %v2028, %v1956
        %2030 = vadd.xlane.f32.xlu0 %v2029
        %v2031 = vpop.xlane.xlu0 %2030
        %v2032 = vadd.f32 %v1957, %v1958
        %v2033 = vadd.f32 %v2032, %v1959
        %v2034 = vadd.f32 %v2033, %v1960
        %2035 = vadd.xlane.f32.xlu0 %v2034
        %v2036 = vpop.xlane.xlu0 %2035
        %v2037 = vadd.f32 %v1961, %v1962
        %v2038 = vadd.f32 %v2037, %v1963
        %v2039 = vadd.f32 %v2038, %v1964
        %2040 = vadd.xlane.f32.xlu0 %v2039
        %v2041 = vpop.xlane.xlu0 %2040
        %v2042 = vadd.f32 %v1965, %v1966
        %v2043 = vadd.f32 %v2042, %v1967
        %v2044 = vadd.f32 %v2043, %v1968
        %2045 = vadd.xlane.f32.xlu0 %v2044
        %v2046 = vpop.xlane.xlu0 %2045
        %v2047 = vadd.f32 %v1969, %v1970
        %v2048 = vadd.f32 %v2047, %v1971
        %v2049 = vadd.f32 %v2048, %v1972
        %2050 = vadd.xlane.f32.xlu0 %v2049
        %v2051 = vpop.xlane.xlu0 %2050
        %v2052 = vadd.f32 %v1973, %v1974
        %v2053 = vadd.f32 %v2052, %v1975
        %v2054 = vadd.f32 %v2053, %v1976
        %2055 = vadd.xlane.f32.xlu0 %v2054
        %v2056 = vpop.xlane.xlu0 %2055
        %v2057 = vmul.f32 %v1913, %v1913
        %v2058 = vmul.f32 %v1914, %v1914
        %v2059 = vmul.f32 %v1915, %v1915
        %v2060 = vmul.f32 %v1916, %v1916
        %v2061 = vmul.f32 %v1917, %v1917
        %v2062 = vmul.f32 %v1918, %v1918
        %v2063 = vmul.f32 %v1919, %v1919
        %v2064 = vmul.f32 %v1920, %v1920
        %v2065 = vmul.f32 %v1921, %v1921
        %v2066 = vmul.f32 %v1922, %v1922
        %v2067 = vmul.f32 %v1923, %v1923
        %v2068 = vmul.f32 %v1924, %v1924
        %v2069 = vmul.f32 %v1925, %v1925
        %v2070 = vmul.f32 %v1926, %v1926
        %v2071 = vmul.f32 %v1927, %v1927
        %v2072 = vmul.f32 %v1928, %v1928
        %v2073 = vmul.f32 %v1929, %v1929
        %v2074 = vmul.f32 %v1930, %v1930
        %v2075 = vmul.f32 %v1931, %v1931
        %v2076 = vmul.f32 %v1932, %v1932
        %v2077 = vmul.f32 %v1933, %v1933
        %v2078 = vmul.f32 %v1934, %v1934
        %v2079 = vmul.f32 %v1935, %v1935
        %v2080 = vmul.f32 %v1936, %v1936
        %v2081 = vmul.f32 %v1937, %v1937
        %v2082 = vmul.f32 %v1938, %v1938
        %v2083 = vmul.f32 %v1939, %v1939
        %v2084 = vmul.f32 %v1940, %v1940
        %v2085 = vmul.f32 %v1941, %v1941
        %v2086 = vmul.f32 %v1942, %v1942
        %v2087 = vmul.f32 %v1943, %v1943
        %v2088 = vmul.f32 %v1944, %v1944
        %v2089 = vmul.f32 %v1945, %v1945
        %v2090 = vmul.f32 %v1946, %v1946
        %v2091 = vmul.f32 %v1947, %v1947
        %v2092 = vmul.f32 %v1948, %v1948
        %v2093 = vmul.f32 %v1949, %v1949
        %v2094 = vmul.f32 %v1950, %v1950
        %v2095 = vmul.f32 %v1951, %v1951
        %v2096 = vmul.f32 %v1952, %v1952
        %v2097 = vmul.f32 %v1953, %v1953
        %v2098 = vmul.f32 %v1954, %v1954
        %v2099 = vmul.f32 %v1955, %v1955
        %v2100 = vmul.f32 %v1956, %v1956
        %v2101 = vmul.f32 %v1957, %v1957
        %v2102 = vmul.f32 %v1958, %v1958
        %v2103 = vmul.f32 %v1959, %v1959
        %v2104 = vmul.f32 %v1960, %v1960
        %v2105 = vmul.f32 %v1961, %v1961
        %v2106 = vmul.f32 %v1962, %v1962
        %v2107 = vmul.f32 %v1963, %v1963
        %v2108 = vmul.f32 %v1964, %v1964
        %v2109 = vmul.f32 %v1965, %v1965
        %v2110 = vmul.f32 %v1966, %v1966
        %v2111 = vmul.f32 %v1967, %v1967
        %v2112 = vmul.f32 %v1968, %v1968
        %v2113 = vmul.f32 %v1969, %v1969
        %v2114 = vmul.f32 %v1970, %v1970
        %v2115 = vmul.f32 %v1971, %v1971
        %v2116 = vmul.f32 %v1972, %v1972
        %v2117 = vmul.f32 %v1973, %v1973
        %v2118 = vmul.f32 %v1974, %v1974
        %v2119 = vmul.f32 %v1975, %v1975
        %v2120 = vmul.f32 %v1976, %v1976
        %v2121 = vadd.f32 %v2057, %v2058
        %v2122 = vadd.f32 %v2121, %v2059
        %v2123 = vadd.f32 %v2122, %v2060
        %2124 = vadd.xlane.f32.xlu0 %v2123
        %v2125 = vpop.xlane.xlu0 %2124
        %v2126 = vadd.f32 %v2061, %v2062
        %v2127 = vadd.f32 %v2126, %v2063
        %v2128 = vadd.f32 %v2127, %v2064
        %2129 = vadd.xlane.f32.xlu0 %v2128
        %v2130 = vpop.xlane.xlu0 %2129
        %v2131 = vadd.f32 %v2065, %v2066
        %v2132 = vadd.f32 %v2131, %v2067
        %v2133 = vadd.f32 %v2132, %v2068
        %2134 = vadd.xlane.f32.xlu0 %v2133
        %v2135 = vpop.xlane.xlu0 %2134
        %v2136 = vadd.f32 %v2069, %v2070
        %v2137 = vadd.f32 %v2136, %v2071
        %v2138 = vadd.f32 %v2137, %v2072
        %2139 = vadd.xlane.f32.xlu0 %v2138
        %v2140 = vpop.xlane.xlu0 %2139
        %v2141 = vadd.f32 %v2073, %v2074
        %v2142 = vadd.f32 %v2141, %v2075
        %v2143 = vadd.f32 %v2142, %v2076
        %2144 = vadd.xlane.f32.xlu0 %v2143
        %v2145 = vpop.xlane.xlu0 %2144
        %v2146 = vadd.f32 %v2077, %v2078
        %v2147 = vadd.f32 %v2146, %v2079
        %v2148 = vadd.f32 %v2147, %v2080
        %2149 = vadd.xlane.f32.xlu0 %v2148
        %v2150 = vpop.xlane.xlu0 %2149
        %v2151 = vadd.f32 %v2081, %v2082
        %v2152 = vadd.f32 %v2151, %v2083
        %v2153 = vadd.f32 %v2152, %v2084
        %2154 = vadd.xlane.f32.xlu0 %v2153
        %v2155 = vpop.xlane.xlu0 %2154
        %v2156 = vadd.f32 %v2085, %v2086
        %v2157 = vadd.f32 %v2156, %v2087
        %v2158 = vadd.f32 %v2157, %v2088
        %2159 = vadd.xlane.f32.xlu0 %v2158
        %v2160 = vpop.xlane.xlu0 %2159
        %v2161 = vadd.f32 %v2089, %v2090
        %v2162 = vadd.f32 %v2161, %v2091
        %v2163 = vadd.f32 %v2162, %v2092
        %2164 = vadd.xlane.f32.xlu0 %v2163
        %v2165 = vpop.xlane.xlu0 %2164
        %v2166 = vadd.f32 %v2093, %v2094
        %v2167 = vadd.f32 %v2166, %v2095
        %v2168 = vadd.f32 %v2167, %v2096
        %2169 = vadd.xlane.f32.xlu0 %v2168
        %v2170 = vpop.xlane.xlu0 %2169
        %v2171 = vadd.f32 %v2097, %v2098
        %v2172 = vadd.f32 %v2171, %v2099
        %v2173 = vadd.f32 %v2172, %v2100
        %2174 = vadd.xlane.f32.xlu0 %v2173
        %v2175 = vpop.xlane.xlu0 %2174
        %v2176 = vadd.f32 %v2101, %v2102
        %v2177 = vadd.f32 %v2176, %v2103
        %v2178 = vadd.f32 %v2177, %v2104
        %2179 = vadd.xlane.f32.xlu0 %v2178
        %v2180 = vpop.xlane.xlu0 %2179
        %v2181 = vadd.f32 %v2105, %v2106
        %v2182 = vadd.f32 %v2181, %v2107
        %v2183 = vadd.f32 %v2182, %v2108
        %2184 = vadd.xlane.f32.xlu0 %v2183
        %v2185 = vpop.xlane.xlu0 %2184
        %v2186 = vadd.f32 %v2109, %v2110
        %v2187 = vadd.f32 %v2186, %v2111
        %v2188 = vadd.f32 %v2187, %v2112
        %2189 = vadd.xlane.f32.xlu0 %v2188
        %v2190 = vpop.xlane.xlu0 %2189
        %v2191 = vadd.f32 %v2113, %v2114
        %v2192 = vadd.f32 %v2191, %v2115
        %v2193 = vadd.f32 %v2192, %v2116
        %2194 = vadd.xlane.f32.xlu0 %v2193
        %v2195 = vpop.xlane.xlu0 %2194
        %v2196 = vadd.f32 %v2117, %v2118
        %v2197 = vadd.f32 %v2196, %v2119
        %v2198 = vadd.f32 %v2197, %v2120
        %2199 = vadd.xlane.f32.xlu0 %v2198
        %v2200 = vpop.xlane.xlu0 %2199
        %v2201 = vmul.f32 %v1981, 0.001953125
        %v2202 = vmul.f32 %v1986, 0.001953125
        %v2203 = vmul.f32 %v1991, 0.001953125
        %v2204 = vmul.f32 %v1996, 0.001953125
        %v2205 = vmul.f32 %v2001, 0.001953125
        %v2206 = vmul.f32 %v2006, 0.001953125
        %v2207 = vmul.f32 %v2011, 0.001953125
        %v2208 = vmul.f32 %v2016, 0.001953125
        %v2209 = vmul.f32 %v2021, 0.001953125
        %v2210 = vmul.f32 %v2026, 0.001953125
        %v2211 = vmul.f32 %v2031, 0.001953125
        %v2212 = vmul.f32 %v2036, 0.001953125
        %v2213 = vmul.f32 %v2041, 0.001953125
        %v2214 = vmul.f32 %v2046, 0.001953125
        %v2215 = vmul.f32 %v2051, 0.001953125
        %v2216 = vmul.f32 %v2056, 0.001953125
        %v2217 = vmul.f32 %v2125, 0.001953125
        %v2218 = vmul.f32 %v2130, 0.001953125
        %v2219 = vmul.f32 %v2135, 0.001953125
        %v2220 = vmul.f32 %v2140, 0.001953125
        %v2221 = vmul.f32 %v2145, 0.001953125
        %v2222 = vmul.f32 %v2150, 0.001953125
        %v2223 = vmul.f32 %v2155, 0.001953125
        %v2224 = vmul.f32 %v2160, 0.001953125
        %v2225 = vmul.f32 %v2165, 0.001953125
        %v2226 = vmul.f32 %v2170, 0.001953125
        %v2227 = vmul.f32 %v2175, 0.001953125
        %v2228 = vmul.f32 %v2180, 0.001953125
        %v2229 = vmul.f32 %v2185, 0.001953125
        %v2230 = vmul.f32 %v2190, 0.001953125
        %v2231 = vmul.f32 %v2195, 0.001953125
        %v2232 = vmul.f32 %v2200, 0.001953125
        %v2233 = vmul.f32 %v2201, %v2201
        %v2234 = vmul.f32 %v2202, %v2202
        %v2235 = vmul.f32 %v2203, %v2203
        %v2236 = vmul.f32 %v2204, %v2204
        %v2237 = vmul.f32 %v2205, %v2205
        %v2238 = vmul.f32 %v2206, %v2206
        %v2239 = vmul.f32 %v2207, %v2207
        %v2240 = vmul.f32 %v2208, %v2208
        %v2241 = vmul.f32 %v2209, %v2209
        %v2242 = vmul.f32 %v2210, %v2210
        %v2243 = vmul.f32 %v2211, %v2211
        %v2244 = vmul.f32 %v2212, %v2212
        %v2245 = vmul.f32 %v2213, %v2213
        %v2246 = vmul.f32 %v2214, %v2214
        %v2247 = vmul.f32 %v2215, %v2215
        %v2248 = vmul.f32 %v2216, %v2216
        %v2249 = vsub.f32 %v2217, %v2233
        %v2250 = vsub.f32 %v2218, %v2234
        %v2251 = vsub.f32 %v2219, %v2235
        %v2252 = vsub.f32 %v2220, %v2236
        %v2253 = vsub.f32 %v2221, %v2237
        %v2254 = vsub.f32 %v2222, %v2238
        %v2255 = vsub.f32 %v2223, %v2239
        %v2256 = vsub.f32 %v2224, %v2240
        %v2257 = vsub.f32 %v2225, %v2241
        %v2258 = vsub.f32 %v2226, %v2242
        %v2259 = vsub.f32 %v2227, %v2243
        %v2260 = vsub.f32 %v2228, %v2244
        %v2261 = vsub.f32 %v2229, %v2245
        %v2262 = vsub.f32 %v2230, %v2246
        %v2263 = vsub.f32 %v2231, %v2247
        %v2264 = vsub.f32 %v2232, %v2248
        %v2265 = vmax.f32 %v2249, 0.0
        %v2266 = vmax.f32 %v2250, 0.0
        %v2267 = vmax.f32 %v2251, 0.0
        %v2268 = vmax.f32 %v2252, 0.0
        %v2269 = vmax.f32 %v2253, 0.0
        %v2270 = vmax.f32 %v2254, 0.0
        %v2271 = vmax.f32 %v2255, 0.0
        %v2272 = vmax.f32 %v2256, 0.0
        %v2273 = vmax.f32 %v2257, 0.0
        %v2274 = vmax.f32 %v2258, 0.0
        %v2275 = vmax.f32 %v2259, 0.0
        %v2276 = vmax.f32 %v2260, 0.0
        %v2277 = vmax.f32 %v2261, 0.0
        %v2278 = vmax.f32 %v2262, 0.0
        %v2279 = vmax.f32 %v2263, 0.0
        %v2280 = vmax.f32 %v2264, 0.0
        %v2281 = vsub.f32 %v1913, %v2201
        %v2282 = vsub.f32 %v1914, %v2201
        %v2283 = vsub.f32 %v1915, %v2201
        %v2284 = vsub.f32 %v1916, %v2201
        %v2285 = vsub.f32 %v1917, %v2202
        %v2286 = vsub.f32 %v1918, %v2202
        %v2287 = vsub.f32 %v1919, %v2202
        %v2288 = vsub.f32 %v1920, %v2202
        %v2289 = vsub.f32 %v1921, %v2203
        %v2290 = vsub.f32 %v1922, %v2203
        %v2291 = vsub.f32 %v1923, %v2203
        %v2292 = vsub.f32 %v1924, %v2203
        %v2293 = vsub.f32 %v1925, %v2204
        %v2294 = vsub.f32 %v1926, %v2204
        %v2295 = vsub.f32 %v1927, %v2204
        %v2296 = vsub.f32 %v1928, %v2204
        %v2297 = vsub.f32 %v1929, %v2205
        %v2298 = vsub.f32 %v1930, %v2205
        %v2299 = vsub.f32 %v1931, %v2205
        %v2300 = vsub.f32 %v1932, %v2205
        %v2301 = vsub.f32 %v1933, %v2206
        %v2302 = vsub.f32 %v1934, %v2206
        %v2303 = vsub.f32 %v1935, %v2206
        %v2304 = vsub.f32 %v1936, %v2206
        %v2305 = vsub.f32 %v1937, %v2207
        %v2306 = vsub.f32 %v1938, %v2207
        %v2307 = vsub.f32 %v1939, %v2207
        %v2308 = vsub.f32 %v1940, %v2207
        %v2309 = vsub.f32 %v1941, %v2208
        %v2310 = vsub.f32 %v1942, %v2208
        %v2311 = vsub.f32 %v1943, %v2208
        %v2312 = vsub.f32 %v1944, %v2208
        %v2313 = vsub.f32 %v1945, %v2209
        %v2314 = vsub.f32 %v1946, %v2209
        %v2315 = vsub.f32 %v1947, %v2209
        %v2316 = vsub.f32 %v1948, %v2209
        %v2317 = vsub.f32 %v1949, %v2210
        %v2318 = vsub.f32 %v1950, %v2210
        %v2319 = vsub.f32 %v1951, %v2210
        %v2320 = vsub.f32 %v1952, %v2210
        %v2321 = vsub.f32 %v1953, %v2211
        %v2322 = vsub.f32 %v1954, %v2211
        %v2323 = vsub.f32 %v1955, %v2211
        %v2324 = vsub.f32 %v1956, %v2211
        %v2325 = vsub.f32 %v1957, %v2212
        %v2326 = vsub.f32 %v1958, %v2212
        %v2327 = vsub.f32 %v1959, %v2212
        %v2328 = vsub.f32 %v1960, %v2212
        %v2329 = vsub.f32 %v1961, %v2213
        %v2330 = vsub.f32 %v1962, %v2213
        %v2331 = vsub.f32 %v1963, %v2213
        %v2332 = vsub.f32 %v1964, %v2213
        %v2333 = vsub.f32 %v1965, %v2214
        %v2334 = vsub.f32 %v1966, %v2214
        %v2335 = vsub.f32 %v1967, %v2214
        %v2336 = vsub.f32 %v1968, %v2214
        %v2337 = vsub.f32 %v1969, %v2215
        %v2338 = vsub.f32 %v1970, %v2215
        %v2339 = vsub.f32 %v1971, %v2215
        %v2340 = vsub.f32 %v1972, %v2215
        %v2341 = vsub.f32 %v1973, %v2216
        %v2342 = vsub.f32 %v1974, %v2216
        %v2343 = vsub.f32 %v1975, %v2216
        %v2344 = vsub.f32 %v1976, %v2216
        %v2345 = vadd.f32 %v2265, 1e-05
        %v2346 = vadd.f32 %v2266, 1e-05
        %v2347 = vadd.f32 %v2267, 1e-05
        %v2348 = vadd.f32 %v2268, 1e-05
        %v2349 = vadd.f32 %v2269, 1e-05
        %v2350 = vadd.f32 %v2270, 1e-05
        %v2351 = vadd.f32 %v2271, 1e-05
        %v2352 = vadd.f32 %v2272, 1e-05
        %v2353 = vadd.f32 %v2273, 1e-05
        %v2354 = vadd.f32 %v2274, 1e-05
        %v2355 = vadd.f32 %v2275, 1e-05
        %v2356 = vadd.f32 %v2276, 1e-05
        %v2357 = vadd.f32 %v2277, 1e-05
        %v2358 = vadd.f32 %v2278, 1e-05
        %v2359 = vadd.f32 %v2279, 1e-05
        %v2360 = vadd.f32 %v2280, 1e-05
        %v2361 = vrsqrt.pop %v2345
        %v2362 = vmul.f32 %v2361, %v2345
        %v2363 = vmul.f32 %v2362, %v2361
        %v2364 = vmul.f32 0.5, %v2363
        %v2365 = vsub.f32 1.5, %v2364
        %v2366 = vmul.f32 %v2361, %v2365
        %vm2367 = vweird.f32 %v2345
        %vm2368 = vweird.f32 %v2361
        %vm2369 = vmor %vm2367, %vm2368
        %v2370 = vsel %vm2369, %v2361, %v2366
        %v2371 = vrsqrt.pop %v2346
        %v2372 = vmul.f32 %v2371, %v2346
        %v2373 = vmul.f32 %v2372, %v2371
        %v2374 = vmul.f32 0.5, %v2373
        %v2375 = vsub.f32 1.5, %v2374
        %v2376 = vmul.f32 %v2371, %v2375
        %vm2377 = vweird.f32 %v2346
        %vm2378 = vweird.f32 %v2371
        %vm2379 = vmor %vm2377, %vm2378
        %v2380 = vsel %vm2379, %v2371, %v2376
        %v2381 = vrsqrt.pop %v2347
        %v2382 = vmul.f32 %v2381, %v2347
        %v2383 = vmul.f32 %v2382, %v2381
        %v2384 = vmul.f32 0.5, %v2383
        %v2385 = vsub.f32 1.5, %v2384
        %v2386 = vmul.f32 %v2381, %v2385
        %vm2387 = vweird.f32 %v2347
        %vm2388 = vweird.f32 %v2381
        %vm2389 = vmor %vm2387, %vm2388
        %v2390 = vsel %vm2389, %v2381, %v2386
        %v2391 = vrsqrt.pop %v2348
        %v2392 = vmul.f32 %v2391, %v2348
        %v2393 = vmul.f32 %v2392, %v2391
        %v2394 = vmul.f32 0.5, %v2393
        %v2395 = vsub.f32 1.5, %v2394
        %v2396 = vmul.f32 %v2391, %v2395
        %vm2397 = vweird.f32 %v2348
        %vm2398 = vweird.f32 %v2391
        %vm2399 = vmor %vm2397, %vm2398
        %v2400 = vsel %vm2399, %v2391, %v2396
        %v2401 = vrsqrt.pop %v2349
        %v2402 = vmul.f32 %v2401, %v2349
        %v2403 = vmul.f32 %v2402, %v2401
        %v2404 = vmul.f32 0.5, %v2403
        %v2405 = vsub.f32 1.5, %v2404
        %v2406 = vmul.f32 %v2401, %v2405
        %vm2407 = vweird.f32 %v2349
        %vm2408 = vweird.f32 %v2401
        %vm2409 = vmor %vm2407, %vm2408
        %v2410 = vsel %vm2409, %v2401, %v2406
        %v2411 = vrsqrt.pop %v2350
        %v2412 = vmul.f32 %v2411, %v2350
        %v2413 = vmul.f32 %v2412, %v2411
        %v2414 = vmul.f32 0.5, %v2413
        %v2415 = vsub.f32 1.5, %v2414
        %v2416 = vmul.f32 %v2411, %v2415
        %vm2417 = vweird.f32 %v2350
        %vm2418 = vweird.f32 %v2411
        %vm2419 = vmor %vm2417, %vm2418
        %v2420 = vsel %vm2419, %v2411, %v2416
        %v2421 = vrsqrt.pop %v2351
        %v2422 = vmul.f32 %v2421, %v2351
        %v2423 = vmul.f32 %v2422, %v2421
        %v2424 = vmul.f32 0.5, %v2423
        %v2425 = vsub.f32 1.5, %v2424
        %v2426 = vmul.f32 %v2421, %v2425
        %vm2427 = vweird.f32 %v2351
        %vm2428 = vweird.f32 %v2421
        %vm2429 = vmor %vm2427, %vm2428
        %v2430 = vsel %vm2429, %v2421, %v2426
        %v2431 = vrsqrt.pop %v2352
        %v2432 = vmul.f32 %v2431, %v2352
        %v2433 = vmul.f32 %v2432, %v2431
        %v2434 = vmul.f32 0.5, %v2433
        %v2435 = vsub.f32 1.5, %v2434
        %v2436 = vmul.f32 %v2431, %v2435
        %vm2437 = vweird.f32 %v2352
        %vm2438 = vweird.f32 %v2431
        %vm2439 = vmor %vm2437, %vm2438
        %v2440 = vsel %vm2439, %v2431, %v2436
        %v2441 = vrsqrt.pop %v2353
        %v2442 = vmul.f32 %v2441, %v2353
        %v2443 = vmul.f32 %v2442, %v2441
        %v2444 = vmul.f32 0.5, %v2443
        %v2445 = vsub.f32 1.5, %v2444
        %v2446 = vmul.f32 %v2441, %v2445
        %vm2447 = vweird.f32 %v2353
        %vm2448 = vweird.f32 %v2441
        %vm2449 = vmor %vm2447, %vm2448
        %v2450 = vsel %vm2449, %v2441, %v2446
        %v2451 = vrsqrt.pop %v2354
        %v2452 = vmul.f32 %v2451, %v2354
        %v2453 = vmul.f32 %v2452, %v2451
        %v2454 = vmul.f32 0.5, %v2453
        %v2455 = vsub.f32 1.5, %v2454
        %v2456 = vmul.f32 %v2451, %v2455
        %vm2457 = vweird.f32 %v2354
        %vm2458 = vweird.f32 %v2451
        %vm2459 = vmor %vm2457, %vm2458
        %v2460 = vsel %vm2459, %v2451, %v2456
        %v2461 = vrsqrt.pop %v2355
        %v2462 = vmul.f32 %v2461, %v2355
        %v2463 = vmul.f32 %v2462, %v2461
        %v2464 = vmul.f32 0.5, %v2463
        %v2465 = vsub.f32 1.5, %v2464
        %v2466 = vmul.f32 %v2461, %v2465
        %vm2467 = vweird.f32 %v2355
        %vm2468 = vweird.f32 %v2461
        %vm2469 = vmor %vm2467, %vm2468
        %v2470 = vsel %vm2469, %v2461, %v2466
        %v2471 = vrsqrt.pop %v2356
        %v2472 = vmul.f32 %v2471, %v2356
        %v2473 = vmul.f32 %v2472, %v2471
        %v2474 = vmul.f32 0.5, %v2473
        %v2475 = vsub.f32 1.5, %v2474
        %v2476 = vmul.f32 %v2471, %v2475
        %vm2477 = vweird.f32 %v2356
        %vm2478 = vweird.f32 %v2471
        %vm2479 = vmor %vm2477, %vm2478
        %v2480 = vsel %vm2479, %v2471, %v2476
        %v2481 = vrsqrt.pop %v2357
        %v2482 = vmul.f32 %v2481, %v2357
        %v2483 = vmul.f32 %v2482, %v2481
        %v2484 = vmul.f32 0.5, %v2483
        %v2485 = vsub.f32 1.5, %v2484
        %v2486 = vmul.f32 %v2481, %v2485
        %vm2487 = vweird.f32 %v2357
        %vm2488 = vweird.f32 %v2481
        %vm2489 = vmor %vm2487, %vm2488
        %v2490 = vsel %vm2489, %v2481, %v2486
        %v2491 = vrsqrt.pop %v2358
        %v2492 = vmul.f32 %v2491, %v2358
        %v2493 = vmul.f32 %v2492, %v2491
        %v2494 = vmul.f32 0.5, %v2493
        %v2495 = vsub.f32 1.5, %v2494
        %v2496 = vmul.f32 %v2491, %v2495
        %vm2497 = vweird.f32 %v2358
        %vm2498 = vweird.f32 %v2491
        %vm2499 = vmor %vm2497, %vm2498
        %v2500 = vsel %vm2499, %v2491, %v2496
        %v2501 = vrsqrt.pop %v2359
        %v2502 = vmul.f32 %v2501, %v2359
        %v2503 = vmul.f32 %v2502, %v2501
        %v2504 = vmul.f32 0.5, %v2503
        %v2505 = vsub.f32 1.5, %v2504
        %v2506 = vmul.f32 %v2501, %v2505
        %vm2507 = vweird.f32 %v2359
        %vm2508 = vweird.f32 %v2501
        %vm2509 = vmor %vm2507, %vm2508
        %v2510 = vsel %vm2509, %v2501, %v2506
        %v2511 = vrsqrt.pop %v2360
        %v2512 = vmul.f32 %v2511, %v2360
        %v2513 = vmul.f32 %v2512, %v2511
        %v2514 = vmul.f32 0.5, %v2513
        %v2515 = vsub.f32 1.5, %v2514
        %v2516 = vmul.f32 %v2511, %v2515
        %vm2517 = vweird.f32 %v2360
        %vm2518 = vweird.f32 %v2511
        %vm2519 = vmor %vm2517, %vm2518
        %v2520 = vsel %vm2519, %v2511, %v2516
        %v2521 = vmul.f32 %v2281, %v2370
        %v2522 = vmul.f32 %v2282, %v2370
        %v2523 = vmul.f32 %v2283, %v2370
        %v2524 = vmul.f32 %v2284, %v2370
        %v2525 = vmul.f32 %v2285, %v2380
        %v2526 = vmul.f32 %v2286, %v2380
        %v2527 = vmul.f32 %v2287, %v2380
        %v2528 = vmul.f32 %v2288, %v2380
        %v2529 = vmul.f32 %v2289, %v2390
        %v2530 = vmul.f32 %v2290, %v2390
        %v2531 = vmul.f32 %v2291, %v2390
        %v2532 = vmul.f32 %v2292, %v2390
        %v2533 = vmul.f32 %v2293, %v2400
        %v2534 = vmul.f32 %v2294, %v2400
        %v2535 = vmul.f32 %v2295, %v2400
        %v2536 = vmul.f32 %v2296, %v2400
        %v2537 = vmul.f32 %v2297, %v2410
        %v2538 = vmul.f32 %v2298, %v2410
        %v2539 = vmul.f32 %v2299, %v2410
        %v2540 = vmul.f32 %v2300, %v2410
        %v2541 = vmul.f32 %v2301, %v2420
        %v2542 = vmul.f32 %v2302, %v2420
        %v2543 = vmul.f32 %v2303, %v2420
        %v2544 = vmul.f32 %v2304, %v2420
        %v2545 = vmul.f32 %v2305, %v2430
        %v2546 = vmul.f32 %v2306, %v2430
        %v2547 = vmul.f32 %v2307, %v2430
        %v2548 = vmul.f32 %v2308, %v2430
        %v2549 = vmul.f32 %v2309, %v2440
        %v2550 = vmul.f32 %v2310, %v2440
        %v2551 = vmul.f32 %v2311, %v2440
        %v2552 = vmul.f32 %v2312, %v2440
        %v2553 = vmul.f32 %v2313, %v2450
        %v2554 = vmul.f32 %v2314, %v2450
        %v2555 = vmul.f32 %v2315, %v2450
        %v2556 = vmul.f32 %v2316, %v2450
        %v2557 = vmul.f32 %v2317, %v2460
        %v2558 = vmul.f32 %v2318, %v2460
        %v2559 = vmul.f32 %v2319, %v2460
        %v2560 = vmul.f32 %v2320, %v2460
        %v2561 = vmul.f32 %v2321, %v2470
        %v2562 = vmul.f32 %v2322, %v2470
        %v2563 = vmul.f32 %v2323, %v2470
        %v2564 = vmul.f32 %v2324, %v2470
        %v2565 = vmul.f32 %v2325, %v2480
        %v2566 = vmul.f32 %v2326, %v2480
        %v2567 = vmul.f32 %v2327, %v2480
        %v2568 = vmul.f32 %v2328, %v2480
        %v2569 = vmul.f32 %v2329, %v2490
        %v2570 = vmul.f32 %v2330, %v2490
        %v2571 = vmul.f32 %v2331, %v2490
        %v2572 = vmul.f32 %v2332, %v2490
        %v2573 = vmul.f32 %v2333, %v2500
        %v2574 = vmul.f32 %v2334, %v2500
        %v2575 = vmul.f32 %v2335, %v2500
        %v2576 = vmul.f32 %v2336, %v2500
        %v2577 = vmul.f32 %v2337, %v2510
        %v2578 = vmul.f32 %v2338, %v2510
        %v2579 = vmul.f32 %v2339, %v2510
        %v2580 = vmul.f32 %v2340, %v2510
        %v2581 = vmul.f32 %v2341, %v2520
        %v2582 = vmul.f32 %v2342, %v2520
        %v2583 = vmul.f32 %v2343, %v2520
        %v2584 = vmul.f32 %v2344, %v2520
        %v2585 = vld [vmem:[%s6] sm:$0xf]
        %v2587 = vperm.slane %v2585, 0
        %v2588 = vperm.slane %v2585, 1
        %v2589 = vperm.slane %v2585, 2
        %v2590 = vperm.slane %v2585, 3
        %v2595 = vmul.f32 %v2521, %v2587
        %v2596 = vmul.f32 %v2522, %v2588
        %v2597 = vmul.f32 %v2523, %v2589
        %v2598 = vmul.f32 %v2524, %v2590
        %v2599 = vmul.f32 %v2525, %v2587
        %v2600 = vmul.f32 %v2526, %v2588
        %v2601 = vmul.f32 %v2527, %v2589
        %v2602 = vmul.f32 %v2528, %v2590
        %v2603 = vmul.f32 %v2529, %v2587
        %v2604 = vmul.f32 %v2530, %v2588
        %v2605 = vmul.f32 %v2531, %v2589
        %v2606 = vmul.f32 %v2532, %v2590
        %v2607 = vmul.f32 %v2533, %v2587
        %v2608 = vmul.f32 %v2534, %v2588
        %v2609 = vmul.f32 %v2535, %v2589
        %v2610 = vmul.f32 %v2536, %v2590
        %v2611 = vmul.f32 %v2537, %v2587
        %v2612 = vmul.f32 %v2538, %v2588
        %v2613 = vmul.f32 %v2539, %v2589
        %v2614 = vmul.f32 %v2540, %v2590
        %v2615 = vmul.f32 %v2541, %v2587
        %v2616 = vmul.f32 %v2542, %v2588
        %v2617 = vmul.f32 %v2543, %v2589
        %v2618 = vmul.f32 %v2544, %v2590
        %v2619 = vmul.f32 %v2545, %v2587
        %v2620 = vmul.f32 %v2546, %v2588
        %v2621 = vmul.f32 %v2547, %v2589
        %v2622 = vmul.f32 %v2548, %v2590
        %v2623 = vmul.f32 %v2549, %v2587
        %v2624 = vmul.f32 %v2550, %v2588
        %v2625 = vmul.f32 %v2551, %v2589
        %v2626 = vmul.f32 %v2552, %v2590
        %v2627 = vmul.f32 %v2553, %v2587
        %v2628 = vmul.f32 %v2554, %v2588
        %v2629 = vmul.f32 %v2555, %v2589
        %v2630 = vmul.f32 %v2556, %v2590
        %v2631 = vmul.f32 %v2557, %v2587
        %v2632 = vmul.f32 %v2558, %v2588
        %v2633 = vmul.f32 %v2559, %v2589
        %v2634 = vmul.f32 %v2560, %v2590
        %v2635 = vmul.f32 %v2561, %v2587
        %v2636 = vmul.f32 %v2562, %v2588
        %v2637 = vmul.f32 %v2563, %v2589
        %v2638 = vmul.f32 %v2564, %v2590
        %v2639 = vmul.f32 %v2565, %v2587
        %v2640 = vmul.f32 %v2566, %v2588
        %v2641 = vmul.f32 %v2567, %v2589
        %v2642 = vmul.f32 %v2568, %v2590
        %v2643 = vmul.f32 %v2569, %v2587
        %v2644 = vmul.f32 %v2570, %v2588
        %v2645 = vmul.f32 %v2571, %v2589
        %v2646 = vmul.f32 %v2572, %v2590
        %v2647 = vmul.f32 %v2573, %v2587
        %v2648 = vmul.f32 %v2574, %v2588
        %v2649 = vmul.f32 %v2575, %v2589
        %v2650 = vmul.f32 %v2576, %v2590
        %v2651 = vmul.f32 %v2577, %v2587
        %v2652 = vmul.f32 %v2578, %v2588
        %v2653 = vmul.f32 %v2579, %v2589
        %v2654 = vmul.f32 %v2580, %v2590
        %v2655 = vmul.f32 %v2581, %v2587
        %v2656 = vmul.f32 %v2582, %v2588
        %v2657 = vmul.f32 %v2583, %v2589
        %v2658 = vmul.f32 %v2584, %v2590
        %v2659 = vld [vmem:[%s7] sm:$0xf]
        %v2661 = vperm.slane %v2659, 0
        %v2662 = vperm.slane %v2659, 1
        %v2663 = vperm.slane %v2659, 2
        %v2664 = vperm.slane %v2659, 3
        %v2669 = vadd.f32 %v2595, %v2661
        %v2670 = vadd.f32 %v2596, %v2662
        %v2671 = vadd.f32 %v2597, %v2663
        %v2672 = vadd.f32 %v2598, %v2664
        %v2673 = vadd.f32 %v2599, %v2661
        %v2674 = vadd.f32 %v2600, %v2662
        %v2675 = vadd.f32 %v2601, %v2663
        %v2676 = vadd.f32 %v2602, %v2664
        %v2677 = vadd.f32 %v2603, %v2661
        %v2678 = vadd.f32 %v2604, %v2662
        %v2679 = vadd.f32 %v2605, %v2663
        %v2680 = vadd.f32 %v2606, %v2664
        %v2681 = vadd.f32 %v2607, %v2661
        %v2682 = vadd.f32 %v2608, %v2662
        %v2683 = vadd.f32 %v2609, %v2663
        %v2684 = vadd.f32 %v2610, %v2664
        %v2685 = vadd.f32 %v2611, %v2661
        %v2686 = vadd.f32 %v2612, %v2662
        %v2687 = vadd.f32 %v2613, %v2663
        %v2688 = vadd.f32 %v2614, %v2664
        %v2689 = vadd.f32 %v2615, %v2661
        %v2690 = vadd.f32 %v2616, %v2662
        %v2691 = vadd.f32 %v2617, %v2663
        %v2692 = vadd.f32 %v2618, %v2664
        %v2693 = vadd.f32 %v2619, %v2661
        %v2694 = vadd.f32 %v2620, %v2662
        %v2695 = vadd.f32 %v2621, %v2663
        %v2696 = vadd.f32 %v2622, %v2664
        %v2697 = vadd.f32 %v2623, %v2661
        %v2698 = vadd.f32 %v2624, %v2662
        %v2699 = vadd.f32 %v2625, %v2663
        %v2700 = vadd.f32 %v2626, %v2664
        %v2701 = vadd.f32 %v2627, %v2661
        %v2702 = vadd.f32 %v2628, %v2662
        %v2703 = vadd.f32 %v2629, %v2663
        %v2704 = vadd.f32 %v2630, %v2664
        %v2705 = vadd.f32 %v2631, %v2661
        %v2706 = vadd.f32 %v2632, %v2662
        %v2707 = vadd.f32 %v2633, %v2663
        %v2708 = vadd.f32 %v2634, %v2664
        %v2709 = vadd.f32 %v2635, %v2661
        %v2710 = vadd.f32 %v2636, %v2662
        %v2711 = vadd.f32 %v2637, %v2663
        %v2712 = vadd.f32 %v2638, %v2664
        %v2713 = vadd.f32 %v2639, %v2661
        %v2714 = vadd.f32 %v2640, %v2662
        %v2715 = vadd.f32 %v2641, %v2663
        %v2716 = vadd.f32 %v2642, %v2664
        %v2717 = vadd.f32 %v2643, %v2661
        %v2718 = vadd.f32 %v2644, %v2662
        %v2719 = vadd.f32 %v2645, %v2663
        %v2720 = vadd.f32 %v2646, %v2664
        %v2721 = vadd.f32 %v2647, %v2661
        %v2722 = vadd.f32 %v2648, %v2662
        %v2723 = vadd.f32 %v2649, %v2663
        %v2724 = vadd.f32 %v2650, %v2664
        %v2725 = vadd.f32 %v2651, %v2661
        %v2726 = vadd.f32 %v2652, %v2662
        %v2727 = vadd.f32 %v2653, %v2663
        %v2728 = vadd.f32 %v2654, %v2664
        %v2729 = vadd.f32 %v2655, %v2661
        %v2730 = vadd.f32 %v2656, %v2662
        %v2731 = vadd.f32 %v2657, %v2663
        %v2732 = vadd.f32 %v2658, %v2664
        %v2733 = vstv %s393
        %v2734 = vmul.f32 %v1913, %v2733
        %v2735 = vmul.f32 %v1914, %v2733
        %v2736 = vmul.f32 %v1915, %v2733
        %v2737 = vmul.f32 %v1916, %v2733
        %v2738 = vmul.f32 %v1917, %v2733
        %v2739 = vmul.f32 %v1918, %v2733
        %v2740 = vmul.f32 %v1919, %v2733
        %v2741 = vmul.f32 %v1920, %v2733
        %v2742 = vmul.f32 %v1921, %v2733
        %v2743 = vmul.f32 %v1922, %v2733
        %v2744 = vmul.f32 %v1923, %v2733
        %v2745 = vmul.f32 %v1924, %v2733
        %v2746 = vmul.f32 %v1925, %v2733
        %v2747 = vmul.f32 %v1926, %v2733
        %v2748 = vmul.f32 %v1927, %v2733
        %v2749 = vmul.f32 %v1928, %v2733
        %v2750 = vmul.f32 %v1929, %v2733
        %v2751 = vmul.f32 %v1930, %v2733
        %v2752 = vmul.f32 %v1931, %v2733
        %v2753 = vmul.f32 %v1932, %v2733
        %v2754 = vmul.f32 %v1933, %v2733
        %v2755 = vmul.f32 %v1934, %v2733
        %v2756 = vmul.f32 %v1935, %v2733
        %v2757 = vmul.f32 %v1936, %v2733
        %v2758 = vmul.f32 %v1937, %v2733
        %v2759 = vmul.f32 %v1938, %v2733
        %v2760 = vmul.f32 %v1939, %v2733
        %v2761 = vmul.f32 %v1940, %v2733
        %v2762 = vmul.f32 %v1941, %v2733
        %v2763 = vmul.f32 %v1942, %v2733
        %v2764 = vmul.f32 %v1943, %v2733
        %v2765 = vmul.f32 %v1944, %v2733
        %v2766 = vmul.f32 %v1945, %v2733
        %v2767 = vmul.f32 %v1946, %v2733
        %v2768 = vmul.f32 %v1947, %v2733
        %v2769 = vmul.f32 %v1948, %v2733
        %v2770 = vmul.f32 %v1949, %v2733
        %v2771 = vmul.f32 %v1950, %v2733
        %v2772 = vmul.f32 %v1951, %v2733
        %v2773 = vmul.f32 %v1952, %v2733
        %v2774 = vmul.f32 %v1953, %v2733
        %v2775 = vmul.f32 %v1954, %v2733
        %v2776 = vmul.f32 %v1955, %v2733
        %v2777 = vmul.f32 %v1956, %v2733
        %v2778 = vmul.f32 %v1957, %v2733
        %v2779 = vmul.f32 %v1958, %v2733
        %v2780 = vmul.f32 %v1959, %v2733
        %v2781 = vmul.f32 %v1960, %v2733
        %v2782 = vmul.f32 %v1961, %v2733
        %v2783 = vmul.f32 %v1962, %v2733
        %v2784 = vmul.f32 %v1963, %v2733
        %v2785 = vmul.f32 %v1964, %v2733
        %v2786 = vmul.f32 %v1965, %v2733
        %v2787 = vmul.f32 %v1966, %v2733
        %v2788 = vmul.f32 %v1967, %v2733
        %v2789 = vmul.f32 %v1968, %v2733
        %v2790 = vmul.f32 %v1969, %v2733
        %v2791 = vmul.f32 %v1970, %v2733
        %v2792 = vmul.f32 %v1971, %v2733
        %v2793 = vmul.f32 %v1972, %v2733
        %v2794 = vmul.f32 %v1973, %v2733
        %v2795 = vmul.f32 %v1974, %v2733
        %v2796 = vmul.f32 %v1975, %v2733
        %v2797 = vmul.f32 %v1976, %v2733
        %v2798 = vadd.f32 %v2734, %v2669
        %v2799 = vadd.f32 %v2735, %v2670
        %v2800 = vadd.f32 %v2736, %v2671
        %v2801 = vadd.f32 %v2737, %v2672
        %v2802 = vadd.f32 %v2738, %v2673
        %v2803 = vadd.f32 %v2739, %v2674
        %v2804 = vadd.f32 %v2740, %v2675
        %v2805 = vadd.f32 %v2741, %v2676
        %v2806 = vadd.f32 %v2742, %v2677
        %v2807 = vadd.f32 %v2743, %v2678
        %v2808 = vadd.f32 %v2744, %v2679
        %v2809 = vadd.f32 %v2745, %v2680
        %v2810 = vadd.f32 %v2746, %v2681
        %v2811 = vadd.f32 %v2747, %v2682
        %v2812 = vadd.f32 %v2748, %v2683
        %v2813 = vadd.f32 %v2749, %v2684
        %v2814 = vadd.f32 %v2750, %v2685
        %v2815 = vadd.f32 %v2751, %v2686
        %v2816 = vadd.f32 %v2752, %v2687
        %v2817 = vadd.f32 %v2753, %v2688
        %v2818 = vadd.f32 %v2754, %v2689
        %v2819 = vadd.f32 %v2755, %v2690
        %v2820 = vadd.f32 %v2756, %v2691
        %v2821 = vadd.f32 %v2757, %v2692
        %v2822 = vadd.f32 %v2758, %v2693
        %v2823 = vadd.f32 %v2759, %v2694
        %v2824 = vadd.f32 %v2760, %v2695
        %v2825 = vadd.f32 %v2761, %v2696
        %v2826 = vadd.f32 %v2762, %v2697
        %v2827 = vadd.f32 %v2763, %v2698
        %v2828 = vadd.f32 %v2764, %v2699
        %v2829 = vadd.f32 %v2765, %v2700
        %v2830 = vadd.f32 %v2766, %v2701
        %v2831 = vadd.f32 %v2767, %v2702
        %v2832 = vadd.f32 %v2768, %v2703
        %v2833 = vadd.f32 %v2769, %v2704
        %v2834 = vadd.f32 %v2770, %v2705
        %v2835 = vadd.f32 %v2771, %v2706
        %v2836 = vadd.f32 %v2772, %v2707
        %v2837 = vadd.f32 %v2773, %v2708
        %v2838 = vadd.f32 %v2774, %v2709
        %v2839 = vadd.f32 %v2775, %v2710
        %v2840 = vadd.f32 %v2776, %v2711
        %v2841 = vadd.f32 %v2777, %v2712
        %v2842 = vadd.f32 %v2778, %v2713
        %v2843 = vadd.f32 %v2779, %v2714
        %v2844 = vadd.f32 %v2780, %v2715
        %v2845 = vadd.f32 %v2781, %v2716
        %v2846 = vadd.f32 %v2782, %v2717
        %v2847 = vadd.f32 %v2783, %v2718
        %v2848 = vadd.f32 %v2784, %v2719
        %v2849 = vadd.f32 %v2785, %v2720
        %v2850 = vadd.f32 %v2786, %v2721
        %v2851 = vadd.f32 %v2787, %v2722
        %v2852 = vadd.f32 %v2788, %v2723
        %v2853 = vadd.f32 %v2789, %v2724
        %v2854 = vadd.f32 %v2790, %v2725
        %v2855 = vadd.f32 %v2791, %v2726
        %v2856 = vadd.f32 %v2792, %v2727
        %v2857 = vadd.f32 %v2793, %v2728
        %v2858 = vadd.f32 %v2794, %v2729
        %v2859 = vadd.f32 %v2795, %v2730
        %v2860 = vadd.f32 %v2796, %v2731
        %v2861 = vadd.f32 %v2797, %v2732
        %2862 = vst [vmem:[%s357] sm:$0xff] %v2798
        %2863 = vst [vmem:[%s357 + $0x8] sm:$0xff] %v2799
        %2864 = vst [vmem:[%s357 + $0x10] sm:$0xff] %v2800
        %2865 = vst [vmem:[%s357 + $0x18] sm:$0xff] %v2801
        %2866 = vst [vmem:[%s357 + $0x20] sm:$0xff] %v2802
        %2867 = vst [vmem:[%s357 + $0x28] sm:$0xff] %v2803
        %2868 = vst [vmem:[%s357 + $0x30] sm:$0xff] %v2804
        %2869 = vst [vmem:[%s357 + $0x38] sm:$0xff] %v2805
        %2870 = vst [vmem:[%s357 + $0x40] sm:$0xff] %v2806
        %2871 = vst [vmem:[%s357 + $0x48] sm:$0xff] %v2807
        %2872 = vst [vmem:[%s357 + $0x50] sm:$0xff] %v2808
        %2873 = vst [vmem:[%s357 + $0x58] sm:$0xff] %v2809
        %2874 = vst [vmem:[%s357 + $0x60] sm:$0xff] %v2810
        %2875 = vst [vmem:[%s357 + $0x68] sm:$0xff] %v2811
        %2876 = vst [vmem:[%s357 + $0x70] sm:$0xff] %v2812
        %2877 = vst [vmem:[%s357 + $0x78] sm:$0xff] %v2813
        %2878 = vst [vmem:[%s357 + $0x80] sm:$0xff] %v2814
        %2879 = vst [vmem:[%s357 + $0x88] sm:$0xff] %v2815
        %2880 = vst [vmem:[%s357 + $0x90] sm:$0xff] %v2816
        %2881 = vst [vmem:[%s357 + $0x98] sm:$0xff] %v2817
        %2882 = vst [vmem:[%s357 + $0xa0] sm:$0xff] %v2818
        %2883 = vst [vmem:[%s357 + $0xa8] sm:$0xff] %v2819
        %2884 = vst [vmem:[%s357 + $0xb0] sm:$0xff] %v2820
        %2885 = vst [vmem:[%s357 + $0xb8] sm:$0xff] %v2821
        %2886 = vst [vmem:[%s357 + $0xc0] sm:$0xff] %v2822
        %2887 = vst [vmem:[%s357 + $0xc8] sm:$0xff] %v2823
        %2888 = vst [vmem:[%s357 + $0xd0] sm:$0xff] %v2824
        %2889 = vst [vmem:[%s357 + $0xd8] sm:$0xff] %v2825
        %2890 = vst [vmem:[%s357 + $0xe0] sm:$0xff] %v2826
        %2891 = vst [vmem:[%s357 + $0xe8] sm:$0xff] %v2827
        %2892 = vst [vmem:[%s357 + $0xf0] sm:$0xff] %v2828
        %2893 = vst [vmem:[%s357 + $0xf8] sm:$0xff] %v2829
        %2894 = vst [vmem:[%s357 + $0x100] sm:$0xff] %v2830
        %2895 = vst [vmem:[%s357 + $0x108] sm:$0xff] %v2831
        %2896 = vst [vmem:[%s357 + $0x110] sm:$0xff] %v2832
        %2897 = vst [vmem:[%s357 + $0x118] sm:$0xff] %v2833
        %2898 = vst [vmem:[%s357 + $0x120] sm:$0xff] %v2834
        %2899 = vst [vmem:[%s357 + $0x128] sm:$0xff] %v2835
        %2900 = vst [vmem:[%s357 + $0x130] sm:$0xff] %v2836
        %2901 = vst [vmem:[%s357 + $0x138] sm:$0xff] %v2837
        %2902 = vst [vmem:[%s357 + $0x140] sm:$0xff] %v2838
        %2903 = vst [vmem:[%s357 + $0x148] sm:$0xff] %v2839
        %2904 = vst [vmem:[%s357 + $0x150] sm:$0xff] %v2840
        %2905 = vst [vmem:[%s357 + $0x158] sm:$0xff] %v2841
        %2906 = vst [vmem:[%s357 + $0x160] sm:$0xff] %v2842
        %2907 = vst [vmem:[%s357 + $0x168] sm:$0xff] %v2843
        %2908 = vst [vmem:[%s357 + $0x170] sm:$0xff] %v2844
        %2909 = vst [vmem:[%s357 + $0x178] sm:$0xff] %v2845
        %2910 = vst [vmem:[%s357 + $0x180] sm:$0xff] %v2846
        %2911 = vst [vmem:[%s357 + $0x188] sm:$0xff] %v2847
        %2912 = vst [vmem:[%s357 + $0x190] sm:$0xff] %v2848
        %2913 = vst [vmem:[%s357 + $0x198] sm:$0xff] %v2849
        %2914 = vst [vmem:[%s357 + $0x1a0] sm:$0xff] %v2850
        %2915 = vst [vmem:[%s357 + $0x1a8] sm:$0xff] %v2851
        %2916 = vst [vmem:[%s357 + $0x1b0] sm:$0xff] %v2852
        %2917 = vst [vmem:[%s357 + $0x1b8] sm:$0xff] %v2853
        %2918 = vst [vmem:[%s357 + $0x1c0] sm:$0xff] %v2854
        %2919 = vst [vmem:[%s357 + $0x1c8] sm:$0xff] %v2855
        %2920 = vst [vmem:[%s357 + $0x1d0] sm:$0xff] %v2856
        %2921 = vst [vmem:[%s357 + $0x1d8] sm:$0xff] %v2857
        %2922 = vst [vmem:[%s357 + $0x1e0] sm:$0xff] %v2858
        %2923 = vst [vmem:[%s357 + $0x1e8] sm:$0xff] %v2859
        %2924 = vst [vmem:[%s357 + $0x1f0] sm:$0xff] %v2860
        %2925 = vst [vmem:[%s357 + $0x1f8] sm:$0xff] %v2861
        %s2926 = sand.u32 %s208, 1
        %s2927 = scalar_lea.sflag [#allocation4], %s2926
        %s2928 = sand.u32 %s208, 1
        %s2929 = smul.addr %s2928, 512
        %s2930 = scalar_lea.vmem [#allocation9], %s2929
        // Predicated region
        $region65: #{logits_forward.1} parent=51 // pred_check
          %p2931 = pneg %p218
        $region66: #{logits_forward.1} parent=51 // pred_check_branch
          %2933 = sbr.rel (%p2931) target = $region68
        $region67: #{logits_forward.1} parent=51 // pred_region
          %s2934 = smul.u32 16, %s27
          %2936 = vsyncadd %s2927, 0
          %s2937 = smul.addr %s2934, 4
          %s2938 = smul.addr %s2937, 8
          %s2939 = scalar_lea.hbm %s8, %s2938
          %s2940 = sshll.u32 %s2930, 4
          %s2941 = int_to_ptr.vmem [resolvable:$true] %s2940
          %s2942 = sshll.u32 %s2939, 4
          %s2943 = int_to_ptr.hbm [resolvable:$true] %s2942
          %2948 = dma.vmem_to_hbm [thread:$0]  %s2941, 8192, %s2943, %s2927, 512, 512, 32
        $region68: #{logits_forward.1} parent=51 // pred_fallthru
          _
      $region52: #{logits_forward.1} parent=5 // pred_fallthru
        _
      %p2949 = scmp.le.s32.totalorder 2, %s22
      // Predicated region
      $region69: #{logits_forward.1} parent=5 // pred_check
        %p2950 = pneg %p2949
      $region70: #{logits_forward.1} parent=5 // pred_check_branch
        %2952 = sbr.rel (%p2950) target = $region72
      $region71: #{logits_forward.1} parent=5 // pred_region
        %s2953 = ssub.s32 %s22, 2
        // Predicated region
        $region73: #{logits_forward.1} parent=71 // pred_check
          %p2954 = pneg %p224
        $region74: #{logits_forward.1} parent=71 // pred_check_branch
          %2956 = sbr.rel (%p2954) target = $region76
        $region75: #{logits_forward.1} parent=71 // pred_region
          %s2957 = sand.u32 %s209, 1
          %s2958 = scalar_lea.sflag [#allocation4], %s2957
          %s2959 = sand.u32 %s209, 1
          %s2960 = smul.addr %s2959, 512
          %s2961 = scalar_lea.vmem [#allocation9], %s2960
          %2963 = dma.done %s2958, 8192
        $region76: #{logits_forward.1} parent=71 // pred_fallthru
          _
      $region72: #{logits_forward.1} parent=5 // pred_fallthru
        _
    $region6: #{logits_forward.1} parent=1 // loop_footer
      %s26 = sadd.s32 1, %s22
    $region7: #{logits_forward.1} parent=1 // loop_footer_branch
      %21 = sbr.rel target = $region3
    $region8: #{logits_forward.1} parent=1 // loop_exit
      _
    %2964 = vsyncpa [#allocation3], 1
    %s2965 = scalar_lea.sflag [#allocation3], 1
    %2966 = vsyncpa %s2965, 1
    %2967 = vsyncpa [#allocation8], 1
    %2968 = vsyncpa [#allocation4], 1
    %s2969 = scalar_lea.sflag [#allocation4], 1
    %2970 = vsyncpa %s2969, 1
    %2971 = vsyncpa [#allocation5], 1
    %s2972 = scalar_lea.sflag [#allocation5], 1
    %2973 = vsyncpa %s2972, 1

</llo_original>
